<compile_context>
chip_gen: v5e
topology: v5e:2x2
jax: 0.10.0
libtpu: 0.0.40
codegen_flags: <defaults>
</compile_context>

<pallas_src>
import math

import jax
import jax.numpy as jnp
import numpy as np
from jax.experimental import pallas as pl
from jax.experimental.pallas import tpu as pltpu

# ----------------------------- model config ---------------------------------
BATCH = 2
SRC_LEN = 8
D_MODEL = 32
N_HEADS = 2
D_K = 16          # per-head key/query dim
D_V = 16          # per-head value dim
D_FF = 64
ENC_NUM_BLOCK = 2
LN_EPS = 1e-5
NEG_INF = -1e9


def _layer_norm(x, gamma, beta):
    mu = jnp.mean(x, axis=-1, keepdims=True)
    var = jnp.mean((x - mu) ** 2, axis=-1, keepdims=True)
    return (x - mu) * jax.lax.rsqrt(var + LN_EPS) * gamma + beta


# ------------------------------ fused kernel ---------------------------------
def encoder_kernel(x_ref, mask_ref,
                   wqkv_ref, bqkv_ref, wo_ref, bo_ref, ln1g_ref, ln1b_ref,
                   w1_ref, b1_ref, w2_ref, b2_ref, ln2g_ref, ln2b_ref,
                   out_ref, attn_ref):
    """Whole encoder in one invocation, batch fused into the row dimension.

    x_ref    : (B*S, D)          tokens flattened over batch
    mask_ref : (H, B*S, B*S)     additive mask (0 keep / -1e9 drop), block-diag over batch
    wqkv_ref : (L, 3, H, D, Dk)  per-head Q/K/V weights (1/sqrt(dk) folded into Q)
    bqkv_ref : (L, 3, H, 1, Dk)
    wo_ref   : (L, H, Dv, D)     per-head slices of the output projection
    out_ref  : (B*S, D)
    attn_ref : (B*S, L*H*B*S)    lane-packed fused attention maps (unpacked by wrapper)
    """
    BS = BATCH * SRC_LEN
    H = N_HEADS

    x = x_ref[...]                                   # (B*S, D)

    for l in range(ENC_NUM_BLOCK):                   # static unroll over layers
        attn_heads = []
        proj = None
        for h in range(H):                           # static unroll over heads
            # Per-head projections over the WHOLE batch: each matmul yields an
            # exactly-shaped (B*S, Dk) tile, so there is zero lane slicing.
            qh = jnp.dot(x, wqkv_ref[l, 0, h],
                         preferred_element_type=jnp.float32) + bqkv_ref[l, 0, h]
            kh = jnp.dot(x, wqkv_ref[l, 1, h],
                         preferred_element_type=jnp.float32) + bqkv_ref[l, 1, h]
            vh = jnp.dot(x, wqkv_ref[l, 2, h],
                         preferred_element_type=jnp.float32) + bqkv_ref[l, 2, h]

            # q @ k^T with the transpose folded into the MXU op (no XLU vxpose).
            scores = jax.lax.dot_general(
                qh, kh, dimension_numbers=(((1,), (1,)), ((), ())),
                preferred_element_type=jnp.float32)           # (B*S, B*S)
            scores = scores + mask_ref[h]                      # padding + cross-batch
            scores = scores - jnp.max(scores, axis=-1, keepdims=True)
            e = jnp.exp(scores)
            attn = e * pl.reciprocal(jnp.sum(e, axis=-1, keepdims=True), approx=True)
            attn_heads.append(attn)

            ctx = jnp.dot(attn, vh, preferred_element_type=jnp.float32)   # (B*S, Dv)
            # Per-head output projection (avoids a lane-concat of heads);
            # accumulator starts from head 0's product (no zeros init).
            head_proj = jnp.dot(ctx, wo_ref[l, h],
                                preferred_element_type=jnp.float32)       # (B*S, D)
            proj = head_proj if proj is None else proj + head_proj

        attn_out = proj + bo_ref[l]                                        # (B*S, D)
        ln1 = _layer_norm(attn_out + x, ln1g_ref[l], ln1b_ref[l])

        # ---- position-wise FFN (Conv1d kernel_size=1 == Linear) ----
        h1 = jnp.maximum(
            jnp.dot(ln1, w1_ref[l], preferred_element_type=jnp.float32) + b1_ref[l], 0.0)
        h2 = jnp.dot(h1, w2_ref[l], preferred_element_type=jnp.float32) + b2_ref[l]
        x = _layer_norm(h2 + ln1, ln2g_ref[l], ln2b_ref[l])

        # Flush this layer's attention maps now (shorter vreg live range than
        # holding every layer's blocks until the end): one lane-dense store.
        attn_ref[:, l * H * BS:(l + 1) * H * BS] = jnp.concatenate(attn_heads, axis=-1)

    out_ref[...] = x


# ---------------------------- wrapper / packing -------------------------------
def _pack_params(layer_params):
    """Fold 1/sqrt(d_k) into Wq/bq, split Q/K/V/Wo per head, stack over layers."""
    scale = 1.0 / math.sqrt(D_K)
    cols = [[] for _ in range(12)]
    for p in layer_params:
        (wq, bq, wk, bk, wv, bv, wo, bo, g1, be1, w1, b1, w2, b2, g2, be2) = p
        wq_h = (wq * scale).reshape(D_MODEL, N_HEADS, D_K).transpose(1, 0, 2)   # (H, D, Dk)
        wk_h = wk.reshape(D_MODEL, N_HEADS, D_K).transpose(1, 0, 2)
        wv_h = wv.reshape(D_MODEL, N_HEADS, D_V).transpose(1, 0, 2)
        cols[0].append(jnp.stack([wq_h, wk_h, wv_h], axis=0))                   # (3, H, D, Dk)
        bq_h = (bq * scale).reshape(N_HEADS, 1, D_K)
        bk_h = bk.reshape(N_HEADS, 1, D_K)
        bv_h = bv.reshape(N_HEADS, 1, D_V)
        cols[1].append(jnp.stack([bq_h, bk_h, bv_h], axis=0))                   # (3, H, 1, Dk)
        cols[2].append(wo.reshape(N_HEADS, D_V, D_MODEL))                       # (H, Dv, D)
        cols[3].append(bo)
        cols[4].append(g1); cols[5].append(be1)
        cols[6].append(w1); cols[7].append(b1)
        cols[8].append(w2); cols[9].append(b2)
        cols[10].append(g2); cols[11].append(be2)
    return tuple(jnp.stack(c, axis=0) for c in cols)


def _make_additive_mask(enc_self_attn_mask):
    """(B, H, S, S) {0,1} mask -> (H, B*S, B*S) additive mask.

    Padding-masked positions get -1e9; cross-batch blocks (introduced by fusing
    the batch into the row dim) also get -1e9 so they underflow to exactly 0
    after the max-subtracted softmax.
    """
    B, H, S, _ = enc_self_attn_mask.shape
    add = jnp.where(enc_self_attn_mask > 0, jnp.float32(NEG_INF), jnp.float32(0.0))  # (B,H,S,S)
    full = jnp.full((H, B, B, S, S), jnp.float32(NEG_INF))
    full = full.at[:, jnp.arange(B), jnp.arange(B)].set(jnp.transpose(add, (1, 0, 2, 3)))
    return jnp.transpose(full, (0, 1, 3, 2, 4)).reshape(H, B * S, B * S)


def _full_spec(shape):
    nd = len(shape)
    return pl.BlockSpec(shape, lambda i, _nd=nd: (0,) * _nd)


@jax.jit
def encoder_forward(enc_input, enc_self_attn_mask, layer_params):
    """Mirrors Encoder.forward: returns (enc_output, [attn per layer])."""
    B, S, D = enc_input.shape
    H = enc_self_attn_mask.shape[1]
    L = len(layer_params)
    BS = B * S

    packed = _pack_params(layer_params)
    mask_add = _make_additive_mask(enc_self_attn_mask)
    x_flat = enc_input.reshape(BS, D)
    inputs = (x_flat, mask_add) + packed

    out_flat, attn_flat = pl.pallas_call(
        encoder_kernel,
        out_shape=(
            jax.ShapeDtypeStruct((BS, D), jnp.float32),
            jax.ShapeDtypeStruct((BS, L * H * BS), jnp.float32),
        ),
        grid=(1,),                                   # single step: whole problem in VMEM
        in_specs=[_full_spec(a.shape) for a in inputs],
        out_specs=[_full_spec((BS, D)), _full_spec((BS, L * H * BS))],
        compiler_params=pltpu.CompilerParams(dimension_semantics=("arbitrary",)),
    )(*inputs)

    enc_output = out_flat.reshape(B, S, D)
    # (B*S, L*H*B*S) -> (B, S, L, H, B, S) -> batch block-diagonal -> (L, B, H, S, S)
    attn6 = attn_flat.reshape(B, S, L, H, B, S)
    diag = attn6[jnp.arange(B), :, :, :, jnp.arange(B), :]      # (B, S, L, H, S)
    attn = diag.transpose(2, 0, 3, 1, 4)                        # (L, B, H, S, S)
    return enc_output, [attn[l] for l in range(L)]


# --------------------------- parameter construction --------------------------
def init_layer_params(key):
    ks = jax.random.split(key, 8)
    def w(k, shape):
        return jax.random.normal(k, shape, jnp.float32) * 0.02
    wq = w(ks[0], (D_MODEL, N_HEADS * D_K)); bq = jnp.zeros((1, N_HEADS * D_K), jnp.float32)
    wk = w(ks[1], (D_MODEL, N_HEADS * D_K)); bk = jnp.zeros((1, N_HEADS * D_K), jnp.float32)
    wv = w(ks[2], (D_MODEL, N_HEADS * D_V)); bv = jnp.zeros((1, N_HEADS * D_V), jnp.float32)
    wo = w(ks[3], (N_HEADS * D_V, D_MODEL)); bo = jnp.zeros((1, D_MODEL), jnp.float32)
    ln1g = jnp.ones((1, D_MODEL), jnp.float32); ln1b = jnp.zeros((1, D_MODEL), jnp.float32)
    w1 = w(ks[4], (D_MODEL, D_FF)); b1 = jnp.zeros((1, D_FF), jnp.float32)
    w2 = w(ks[5], (D_FF, D_MODEL)); b2 = jnp.zeros((1, D_MODEL), jnp.float32)
    ln2g = jnp.ones((1, D_MODEL), jnp.float32); ln2b = jnp.zeros((1, D_MODEL), jnp.float32)
    return (wq, bq, wk, bk, wv, bv, wo, bo, ln1g, ln1b, w1, b1, w2, b2, ln2g, ln2b)


# ------------------------------- pure-JAX ref --------------------------------
def encoder_layer_ref(x, mask, params):
    (wq, bq, wk, bk, wv, bv, wo, bo, ln1g, ln1b, w1, b1, w2, b2, ln2g, ln2b) = params
    B, S, D = x.shape
    q = (x @ wq + bq).reshape(B, S, N_HEADS, D_K).transpose(0, 2, 1, 3)
    k = (x @ wk + bk).reshape(B, S, N_HEADS, D_K).transpose(0, 2, 1, 3)
    v = (x @ wv + bv).reshape(B, S, N_HEADS, D_V).transpose(0, 2, 1, 3)
    scores = jnp.einsum("bhqd,bhkd->bhqk", q, k) / math.sqrt(D_K)
    scores = jnp.where(mask > 0, -1e9, scores)
    attn = jax.nn.softmax(scores, axis=-1)
    ctx = jnp.einsum("bhqk,bhkd->bhqd", attn, v).transpose(0, 2, 1, 3).reshape(B, S, N_HEADS * D_V)
    def ln(y, g, b):
        mu = y.mean(-1, keepdims=True)
        var = ((y - mu) ** 2).mean(-1, keepdims=True)
        return (y - mu) / jnp.sqrt(var + LN_EPS) * g + b
    o1 = ln(ctx @ wo + bo + x, ln1g, ln1b)
    ffn = jnp.maximum(o1 @ w1 + b1, 0.0) @ w2 + b2
    return ln(ffn + o1, ln2g, ln2b), attn


# ---------------------------------- main --------------------------------------
if __name__ == "__main__":
    key = jax.random.PRNGKey(0)
    k_in, k_p = jax.random.split(key)

    enc_input = jax.random.normal(k_in, (BATCH, SRC_LEN, D_MODEL), jnp.float32)

    # padding-style mask: batch 1 masks its last two key positions (1.0 = masked)
    pad = jnp.zeros((BATCH, SRC_LEN), jnp.float32).at[1, -2:].set(1.0)
    enc_self_attn_mask = jnp.broadcast_to(
        pad[:, None, None, :], (BATCH, N_HEADS, SRC_LEN, SRC_LEN)
    ).astype(jnp.float32)

    layer_keys = jax.random.split(k_p, ENC_NUM_BLOCK)
    layer_params = [init_layer_params(k) for k in layer_keys]

    enc_output, enc_self_attns = encoder_forward(enc_input, enc_self_attn_mask, layer_params)
    enc_output = jax.block_until_ready(enc_output)
    enc_self_attns = [jax.block_until_ready(a) for a in enc_self_attns]

    # sanity check against a pure-JAX reference of the same math (exact softmax);
    # tolerances account for pl.reciprocal(approx=True) in the kernel's softmax.
    ref = enc_input
    ref_attns = []
    for p in layer_params:
        ref, a = encoder_layer_ref(ref, enc_self_attn_mask, p)
        ref_attns.append(a)

    np.testing.assert_allclose(np.asarray(enc_output), np.asarray(ref), rtol=2e-3, atol=2e-3)
    for got, want in zip(enc_self_attns, ref_attns):
        np.testing.assert_allclose(np.asarray(got), np.asarray(want), rtol=5e-3, atol=5e-3)

    print("KERNEL_OK")
</pallas_src>

<mosaic_0001>
module attributes {stable_mosaic.version = 11 : i64} {
  func.func @encoder_kernel(%arg0: i32, %arg1: memref<16x32xf32, #tpu.memory_space<vmem>>, %arg2: memref<2x16x16xf32, #tpu.memory_space<vmem>>, %arg3: memref<2x3x2x32x16xf32, #tpu.memory_space<vmem>>, %arg4: memref<2x3x2x1x16xf32, #tpu.memory_space<vmem>>, %arg5: memref<2x2x16x32xf32, #tpu.memory_space<vmem>>, %arg6: memref<2x1x32xf32, #tpu.memory_space<vmem>>, %arg7: memref<2x1x32xf32, #tpu.memory_space<vmem>>, %arg8: memref<2x1x32xf32, #tpu.memory_space<vmem>>, %arg9: memref<2x32x64xf32, #tpu.memory_space<vmem>>, %arg10: memref<2x1x64xf32, #tpu.memory_space<vmem>>, %arg11: memref<2x64x32xf32, #tpu.memory_space<vmem>>, %arg12: memref<2x1x32xf32, #tpu.memory_space<vmem>>, %arg13: memref<2x1x32xf32, #tpu.memory_space<vmem>>, %arg14: memref<2x1x32xf32, #tpu.memory_space<vmem>>, %arg15: memref<16x32xf32, #tpu.memory_space<vmem>>, %arg16: memref<16x64xf32, #tpu.memory_space<vmem>>) attributes {dimension_semantics = [#tpu.dimension_semantics<arbitrary>], iteration_bounds = array<i64: 1>, scalar_prefetch = 0 : i64, scratch_operands = 0 : i64, tpu.core_type = #tpu.core_type<tc>, window_params = [{pipeline_mode = #tpu.pipeline_mode<synchronous>, transform_indices = @transform_0, window_bounds = array<i64: 16, 32>}, {pipeline_mode = #tpu.pipeline_mode<synchronous>, transform_indices = @transform_1, window_bounds = array<i64: 2, 16, 16>}, {pipeline_mode = #tpu.pipeline_mode<synchronous>, transform_indices = @transform_2, window_bounds = array<i64: 2, 3, 2, 32, 16>}, {pipeline_mode = #tpu.pipeline_mode<synchronous>, transform_indices = @transform_3, window_bounds = array<i64: 2, 3, 2, 1, 16>}, {pipeline_mode = #tpu.pipeline_mode<synchronous>, transform_indices = @transform_4, window_bounds = array<i64: 2, 2, 16, 32>}, {pipeline_mode = #tpu.pipeline_mode<synchronous>, transform_indices = @transform_5, window_bounds = array<i64: 2, 1, 32>}, {pipeline_mode = #tpu.pipeline_mode<synchronous>, transform_indices = @transform_6, window_bounds = array<i64: 2, 1, 32>}, {pipeline_mode = #tpu.pipeline_mode<synchronous>, transform_indices = @transform_7, window_bounds = array<i64: 2, 1, 32>}, {pipeline_mode = #tpu.pipeline_mode<synchronous>, transform_indices = @transform_8, window_bounds = array<i64: 2, 32, 64>}, {pipeline_mode = #tpu.pipeline_mode<synchronous>, transform_indices = @transform_9, window_bounds = array<i64: 2, 1, 64>}, {pipeline_mode = #tpu.pipeline_mode<synchronous>, transform_indices = @transform_10, window_bounds = array<i64: 2, 64, 32>}, {pipeline_mode = #tpu.pipeline_mode<synchronous>, transform_indices = @transform_11, window_bounds = array<i64: 2, 1, 32>}, {pipeline_mode = #tpu.pipeline_mode<synchronous>, transform_indices = @transform_12, window_bounds = array<i64: 2, 1, 32>}, {pipeline_mode = #tpu.pipeline_mode<synchronous>, transform_indices = @transform_13, window_bounds = array<i64: 2, 1, 32>}, {pipeline_mode = #tpu.pipeline_mode<synchronous>, transform_indices = @transform_14, window_bounds = array<i64: 16, 32>}, {pipeline_mode = #tpu.pipeline_mode<synchronous>, transform_indices = @transform_15, window_bounds = array<i64: 16, 64>}]} {
    %c0 = arith.constant 0 : index
    %c0_0 = arith.constant 0 : index
    %0 = vector.load %arg1[%c0, %c0_0] : memref<16x32xf32, #tpu.memory_space<vmem>>, vector<16x32xf32>
    %c0_1 = arith.constant 0 : index
    %c0_2 = arith.constant 0 : index
    %c0_3 = arith.constant 0 : index
    %c0_4 = arith.constant 0 : index
    %c0_5 = arith.constant 0 : index
    %1 = vector.load %arg3[%c0_1, %c0_2, %c0_3, %c0_4, %c0_5] : memref<2x3x2x32x16xf32, #tpu.memory_space<vmem>>, vector<1x1x1x32x16xf32>
    %2 = vector.shape_cast %1 : vector<1x1x1x32x16xf32> to vector<32x16xf32>
    %cst = arith.constant dense<0.000000e+00> : vector<16x16xf32>
    %3 = tpu.matmul %0, %2, %cst {dimension_numbers = #tpu.dot_dimension_numbers<[1], [0], [0], [1], [0, 0, 1, 1], [], []>} : vector<16x32xf32>, vector<32x16xf32>, vector<16x16xf32> -> vector<16x16xf32>
    %c0_6 = arith.constant 0 : index
    %c0_7 = arith.constant 0 : index
    %c0_8 = arith.constant 0 : index
    %c0_9 = arith.constant 0 : index
    %c0_10 = arith.constant 0 : index
    %4 = vector.load %arg4[%c0_6, %c0_7, %c0_8, %c0_9, %c0_10] : memref<2x3x2x1x16xf32, #tpu.memory_space<vmem>>, vector<1x1x1x1x16xf32>
    %5 = vector.shape_cast %4 : vector<1x1x1x1x16xf32> to vector<1x16xf32>
    %6 = vector.broadcast %5 : vector<1x16xf32> to vector<16x16xf32>
    %7 = arith.addf %3, %6 : vector<16x16xf32>
    %c0_11 = arith.constant 0 : index
    %c1 = arith.constant 1 : index
    %c0_12 = arith.constant 0 : index
    %c0_13 = arith.constant 0 : index
    %c0_14 = arith.constant 0 : index
    %8 = vector.load %arg3[%c0_11, %c1, %c0_12, %c0_13, %c0_14] : memref<2x3x2x32x16xf32, #tpu.memory_space<vmem>>, vector<1x1x1x32x16xf32>
    %9 = vector.shape_cast %8 : vector<1x1x1x32x16xf32> to vector<32x16xf32>
    %cst_15 = arith.constant dense<0.000000e+00> : vector<16x16xf32>
    %10 = tpu.matmul %0, %9, %cst_15 {dimension_numbers = #tpu.dot_dimension_numbers<[1], [0], [0], [1], [0, 0, 1, 1], [], []>} : vector<16x32xf32>, vector<32x16xf32>, vector<16x16xf32> -> vector<16x16xf32>
    %c0_16 = arith.constant 0 : index
    %c1_17 = arith.constant 1 : index
    %c0_18 = arith.constant 0 : index
    %c0_19 = arith.constant 0 : index
    %c0_20 = arith.constant 0 : index
    %11 = vector.load %arg4[%c0_16, %c1_17, %c0_18, %c0_19, %c0_20] : memref<2x3x2x1x16xf32, #tpu.memory_space<vmem>>, vector<1x1x1x1x16xf32>
    %12 = vector.shape_cast %11 : vector<1x1x1x1x16xf32> to vector<1x16xf32>
    %13 = vector.broadcast %12 : vector<1x16xf32> to vector<16x16xf32>
    %14 = arith.addf %10, %13 : vector<16x16xf32>
    %c0_21 = arith.constant 0 : index
    %c2 = arith.constant 2 : index
    %c0_22 = arith.constant 0 : index
    %c0_23 = arith.constant 0 : index
    %c0_24 = arith.constant 0 : index
    %15 = vector.load %arg3[%c0_21, %c2, %c0_22, %c0_23, %c0_24] : memref<2x3x2x32x16xf32, #tpu.memory_space<vmem>>, vector<1x1x1x32x16xf32>
    %16 = vector.shape_cast %15 : vector<1x1x1x32x16xf32> to vector<32x16xf32>
    %cst_25 = arith.constant dense<0.000000e+00> : vector<16x16xf32>
    %17 = tpu.matmul %0, %16, %cst_25 {dimension_numbers = #tpu.dot_dimension_numbers<[1], [0], [0], [1], [0, 0, 1, 1], [], []>} : vector<16x32xf32>, vector<32x16xf32>, vector<16x16xf32> -> vector<16x16xf32>
    %c0_26 = arith.constant 0 : index
    %c2_27 = arith.constant 2 : index
    %c0_28 = arith.constant 0 : index
    %c0_29 = arith.constant 0 : index
    %c0_30 = arith.constant 0 : index
    %18 = vector.load %arg4[%c0_26, %c2_27, %c0_28, %c0_29, %c0_30] : memref<2x3x2x1x16xf32, #tpu.memory_space<vmem>>, vector<1x1x1x1x16xf32>
    %19 = vector.shape_cast %18 : vector<1x1x1x1x16xf32> to vector<1x16xf32>
    %20 = vector.broadcast %19 : vector<1x16xf32> to vector<16x16xf32>
    %21 = arith.addf %17, %20 : vector<16x16xf32>
    %cst_31 = arith.constant dense<0.000000e+00> : vector<16x16xf32>
    %22 = tpu.matmul %7, %14, %cst_31 {dimension_numbers = #tpu.dot_dimension_numbers<[1], [1], [0], [0], [0, 0, 1, 0], [], []>} : vector<16x16xf32>, vector<16x16xf32>, vector<16x16xf32> -> vector<16x16xf32>
    %c0_32 = arith.constant 0 : index
    %c0_33 = arith.constant 0 : index
    %c0_34 = arith.constant 0 : index
    %23 = vector.load %arg2[%c0_32, %c0_33, %c0_34] : memref<2x16x16xf32, #tpu.memory_space<vmem>>, vector<1x16x16xf32>
    %24 = vector.shape_cast %23 : vector<1x16x16xf32> to vector<16x16xf32>
    %25 = arith.addf %22, %24 : vector<16x16xf32>
    %cst_35 = arith.constant dense<0xFF800000> : vector<16xf32>
    %26 = vector.multi_reduction <maximumf>, %25, %cst_35 [1] : vector<16x16xf32> to vector<16xf32>
    %27 = vector.shape_cast %26 : vector<16xf32> to vector<16x1xf32>
    %28 = vector.broadcast %27 : vector<16x1xf32> to vector<16x16xf32>
    %29 = arith.subf %25, %28 : vector<16x16xf32>
    %30 = math.exp %29 : vector<16x16xf32>
    %cst_36 = arith.constant dense<0.000000e+00> : vector<16xf32>
    %31 = vector.multi_reduction <add>, %30, %cst_36 [1] : vector<16x16xf32> to vector<16xf32>
    %32 = vector.shape_cast %31 : vector<16xf32> to vector<16x1xf32>
    %33 = tpu.reciprocal %32 {approx = true} : vector<16x1xf32> -> vector<16x1xf32>
    %34 = vector.broadcast %33 : vector<16x1xf32> to vector<16x16xf32>
    %35 = arith.mulf %30, %34 : vector<16x16xf32>
    %cst_37 = arith.constant dense<0.000000e+00> : vector<16x16xf32>
    %36 = tpu.matmul %35, %21, %cst_37 {dimension_numbers = #tpu.dot_dimension_numbers<[1], [0], [0], [1], [0, 0, 1, 1], [], []>} : vector<16x16xf32>, vector<16x16xf32>, vector<16x16xf32> -> vector<16x16xf32>
    %c0_38 = arith.constant 0 : index
    %c0_39 = arith.constant 0 : index
    %c0_40 = arith.constant 0 : index
    %c0_41 = arith.constant 0 : index
    %37 = vector.load %arg5[%c0_38, %c0_39, %c0_40, %c0_41] : memref<2x2x16x32xf32, #tpu.memory_space<vmem>>, vector<1x1x16x32xf32>
    %38 = vector.shape_cast %37 : vector<1x1x16x32xf32> to vector<16x32xf32>
    %cst_42 = arith.constant dense<0.000000e+00> : vector<16x32xf32>
    %39 = tpu.matmul %36, %38, %cst_42 {dimension_numbers = #tpu.dot_dimension_numbers<[1], [0], [0], [1], [0, 0, 1, 1], [], []>} : vector<16x16xf32>, vector<16x32xf32>, vector<16x32xf32> -> vector<16x32xf32>
    %c0_43 = arith.constant 0 : index
    %c0_44 = arith.constant 0 : index
    %c1_45 = arith.constant 1 : index
    %c0_46 = arith.constant 0 : index
    %c0_47 = arith.constant 0 : index
    %40 = vector.load %arg3[%c0_43, %c0_44, %c1_45, %c0_46, %c0_47] : memref<2x3x2x32x16xf32, #tpu.memory_space<vmem>>, vector<1x1x1x32x16xf32>
    %41 = vector.shape_cast %40 : vector<1x1x1x32x16xf32> to vector<32x16xf32>
    %cst_48 = arith.constant dense<0.000000e+00> : vector<16x16xf32>
    %42 = tpu.matmul %0, %41, %cst_48 {dimension_numbers = #tpu.dot_dimension_numbers<[1], [0], [0], [1], [0, 0, 1, 1], [], []>} : vector<16x32xf32>, vector<32x16xf32>, vector<16x16xf32> -> vector<16x16xf32>
    %c0_49 = arith.constant 0 : index
    %c0_50 = arith.constant 0 : index
    %c1_51 = arith.constant 1 : index
    %c0_52 = arith.constant 0 : index
    %c0_53 = arith.constant 0 : index
    %43 = vector.load %arg4[%c0_49, %c0_50, %c1_51, %c0_52, %c0_53] : memref<2x3x2x1x16xf32, #tpu.memory_space<vmem>>, vector<1x1x1x1x16xf32>
    %44 = vector.shape_cast %43 : vector<1x1x1x1x16xf32> to vector<1x16xf32>
    %45 = vector.broadcast %44 : vector<1x16xf32> to vector<16x16xf32>
    %46 = arith.addf %42, %45 : vector<16x16xf32>
    %c0_54 = arith.constant 0 : index
    %c1_55 = arith.constant 1 : index
    %c1_56 = arith.constant 1 : index
    %c0_57 = arith.constant 0 : index
    %c0_58 = arith.constant 0 : index
    %47 = vector.load %arg3[%c0_54, %c1_55, %c1_56, %c0_57, %c0_58] : memref<2x3x2x32x16xf32, #tpu.memory_space<vmem>>, vector<1x1x1x32x16xf32>
    %48 = vector.shape_cast %47 : vector<1x1x1x32x16xf32> to vector<32x16xf32>
    %cst_59 = arith.constant dense<0.000000e+00> : vector<16x16xf32>
    %49 = tpu.matmul %0, %48, %cst_59 {dimension_numbers = #tpu.dot_dimension_numbers<[1], [0], [0], [1], [0, 0, 1, 1], [], []>} : vector<16x32xf32>, vector<32x16xf32>, vector<16x16xf32> -> vector<16x16xf32>
    %c0_60 = arith.constant 0 : index
    %c1_61 = arith.constant 1 : index
    %c1_62 = arith.constant 1 : index
    %c0_63 = arith.constant 0 : index
    %c0_64 = arith.constant 0 : index
    %50 = vector.load %arg4[%c0_60, %c1_61, %c1_62, %c0_63, %c0_64] : memref<2x3x2x1x16xf32, #tpu.memory_space<vmem>>, vector<1x1x1x1x16xf32>
    %51 = vector.shape_cast %50 : vector<1x1x1x1x16xf32> to vector<1x16xf32>
    %52 = vector.broadcast %51 : vector<1x16xf32> to vector<16x16xf32>
    %53 = arith.addf %49, %52 : vector<16x16xf32>
    %c0_65 = arith.constant 0 : index
    %c2_66 = arith.constant 2 : index
    %c1_67 = arith.constant 1 : index
    %c0_68 = arith.constant 0 : index
    %c0_69 = arith.constant 0 : index
    %54 = vector.load %arg3[%c0_65, %c2_66, %c1_67, %c0_68, %c0_69] : memref<2x3x2x32x16xf32, #tpu.memory_space<vmem>>, vector<1x1x1x32x16xf32>
    %55 = vector.shape_cast %54 : vector<1x1x1x32x16xf32> to vector<32x16xf32>
    %cst_70 = arith.constant dense<0.000000e+00> : vector<16x16xf32>
    %56 = tpu.matmul %0, %55, %cst_70 {dimension_numbers = #tpu.dot_dimension_numbers<[1], [0], [0], [1], [0, 0, 1, 1], [], []>} : vector<16x32xf32>, vector<32x16xf32>, vector<16x16xf32> -> vector<16x16xf32>
    %c0_71 = arith.constant 0 : index
    %c2_72 = arith.constant 2 : index
    %c1_73 = arith.constant 1 : index
    %c0_74 = arith.constant 0 : index
    %c0_75 = arith.constant 0 : index
    %57 = vector.load %arg4[%c0_71, %c2_72, %c1_73, %c0_74, %c0_75] : memref<2x3x2x1x16xf32, #tpu.memory_space<vmem>>, vector<1x1x1x1x16xf32>
    %58 = vector.shape_cast %57 : vector<1x1x1x1x16xf32> to vector<1x16xf32>
    %59 = vector.broadcast %58 : vector<1x16xf32> to vector<16x16xf32>
    %60 = arith.addf %56, %59 : vector<16x16xf32>
    %cst_76 = arith.constant dense<0.000000e+00> : vector<16x16xf32>
    %61 = tpu.matmul %46, %53, %cst_76 {dimension_numbers = #tpu.dot_dimension_numbers<[1], [1], [0], [0], [0, 0, 1, 0], [], []>} : vector<16x16xf32>, vector<16x16xf32>, vector<16x16xf32> -> vector<16x16xf32>
    %c1_77 = arith.constant 1 : index
    %c0_78 = arith.constant 0 : index
    %c0_79 = arith.constant 0 : index
    %62 = vector.load %arg2[%c1_77, %c0_78, %c0_79] : memref<2x16x16xf32, #tpu.memory_space<vmem>>, vector<1x16x16xf32>
    %63 = vector.shape_cast %62 : vector<1x16x16xf32> to vector<16x16xf32>
    %64 = arith.addf %61, %63 : vector<16x16xf32>
    %cst_80 = arith.constant dense<0xFF800000> : vector<16xf32>
    %65 = vector.multi_reduction <maximumf>, %64, %cst_80 [1] : vector<16x16xf32> to vector<16xf32>
    %66 = vector.shape_cast %65 : vector<16xf32> to vector<16x1xf32>
    %67 = vector.broadcast %66 : vector<16x1xf32> to vector<16x16xf32>
    %68 = arith.subf %64, %67 : vector<16x16xf32>
    %69 = math.exp %68 : vector<16x16xf32>
    %cst_81 = arith.constant dense<0.000000e+00> : vector<16xf32>
    %70 = vector.multi_reduction <add>, %69, %cst_81 [1] : vector<16x16xf32> to vector<16xf32>
    %71 = vector.shape_cast %70 : vector<16xf32> to vector<16x1xf32>
    %72 = tpu.reciprocal %71 {approx = true} : vector<16x1xf32> -> vector<16x1xf32>
    %73 = vector.broadcast %72 : vector<16x1xf32> to vector<16x16xf32>
    %74 = arith.mulf %69, %73 : vector<16x16xf32>
    %cst_82 = arith.constant dense<0.000000e+00> : vector<16x16xf32>
    %75 = tpu.matmul %74, %60, %cst_82 {dimension_numbers = #tpu.dot_dimension_numbers<[1], [0], [0], [1], [0, 0, 1, 1], [], []>} : vector<16x16xf32>, vector<16x16xf32>, vector<16x16xf32> -> vector<16x16xf32>
    %c0_83 = arith.constant 0 : index
    %c1_84 = arith.constant 1 : index
    %c0_85 = arith.constant 0 : index
    %c0_86 = arith.constant 0 : index
    %76 = vector.load %arg5[%c0_83, %c1_84, %c0_85, %c0_86] : memref<2x2x16x32xf32, #tpu.memory_space<vmem>>, vector<1x1x16x32xf32>
    %77 = vector.shape_cast %76 : vector<1x1x16x32xf32> to vector<16x32xf32>
    %cst_87 = arith.constant dense<0.000000e+00> : vector<16x32xf32>
    %78 = tpu.matmul %75, %77, %cst_87 {dimension_numbers = #tpu.dot_dimension_numbers<[1], [0], [0], [1], [0, 0, 1, 1], [], []>} : vector<16x16xf32>, vector<16x32xf32>, vector<16x32xf32> -> vector<16x32xf32>
    %79 = arith.addf %39, %78 : vector<16x32xf32>
    %c0_88 = arith.constant 0 : index
    %c0_89 = arith.constant 0 : index
    %c0_90 = arith.constant 0 : index
    %80 = vector.load %arg6[%c0_88, %c0_89, %c0_90] : memref<2x1x32xf32, #tpu.memory_space<vmem>>, vector<1x1x32xf32>
    %81 = vector.shape_cast %80 : vector<1x1x32xf32> to vector<1x32xf32>
    %82 = vector.broadcast %81 : vector<1x32xf32> to vector<16x32xf32>
    %83 = arith.addf %79, %82 : vector<16x32xf32>
    %84 = arith.addf %83, %0 : vector<16x32xf32>
    %c0_91 = arith.constant 0 : index
    %c0_92 = arith.constant 0 : index
    %c0_93 = arith.constant 0 : index
    %85 = vector.load %arg7[%c0_91, %c0_92, %c0_93] : memref<2x1x32xf32, #tpu.memory_space<vmem>>, vector<1x1x32xf32>
    %86 = vector.shape_cast %85 : vector<1x1x32xf32> to vector<1x32xf32>
    %c0_94 = arith.constant 0 : index
    %c0_95 = arith.constant 0 : index
    %c0_96 = arith.constant 0 : index
    %87 = vector.load %arg8[%c0_94, %c0_95, %c0_96] : memref<2x1x32xf32, #tpu.memory_space<vmem>>, vector<1x1x32xf32>
    %88 = vector.shape_cast %87 : vector<1x1x32xf32> to vector<1x32xf32>
    %cst_97 = arith.constant dense<0.000000e+00> : vector<16xf32>
    %89 = vector.multi_reduction <add>, %84, %cst_97 [1] : vector<16x32xf32> to vector<16xf32>
    %90 = vector.shape_cast %89 : vector<16xf32> to vector<16x1xf32>
    %cst_98 = arith.constant 3.200000e+01 : f32
    %91 = vector.broadcast %cst_98 : f32 to vector<16x1xf32>
    %92 = arith.divf %90, %91 : vector<16x1xf32>
    %93 = vector.broadcast %92 : vector<16x1xf32> to vector<16x32xf32>
    %94 = arith.subf %84, %93 : vector<16x32xf32>
    %95 = arith.mulf %94, %94 : vector<16x32xf32>
    %cst_99 = arith.constant dense<0.000000e+00> : vector<16xf32>
    %96 = vector.multi_reduction <add>, %95, %cst_99 [1] : vector<16x32xf32> to vector<16xf32>
    %97 = vector.shape_cast %96 : vector<16xf32> to vector<16x1xf32>
    %cst_100 = arith.constant 3.200000e+01 : f32
    %98 = vector.broadcast %cst_100 : f32 to vector<16x1xf32>
    %99 = arith.divf %97, %98 : vector<16x1xf32>
    %100 = vector.broadcast %92 : vector<16x1xf32> to vector<16x32xf32>
    %101 = arith.subf %84, %100 : vector<16x32xf32>
    %cst_101 = arith.constant 9.99999974E-6 : f32
    %102 = vector.broadcast %cst_101 : f32 to vector<16x1xf32>
    %103 = arith.addf %99, %102 : vector<16x1xf32>
    %104 = math.rsqrt %103 : vector<16x1xf32>
    %105 = vector.broadcast %104 : vector<16x1xf32> to vector<16x32xf32>
    %106 = arith.mulf %101, %105 : vector<16x32xf32>
    %107 = vector.broadcast %86 : vector<1x32xf32> to vector<16x32xf32>
    %108 = arith.mulf %106, %107 : vector<16x32xf32>
    %109 = vector.broadcast %88 : vector<1x32xf32> to vector<16x32xf32>
    %110 = arith.addf %108, %109 : vector<16x32xf32>
    %c0_102 = arith.constant 0 : index
    %c0_103 = arith.constant 0 : index
    %c0_104 = arith.constant 0 : index
    %111 = vector.load %arg9[%c0_102, %c0_103, %c0_104] : memref<2x32x64xf32, #tpu.memory_space<vmem>>, vector<1x32x64xf32>
    %112 = vector.shape_cast %111 : vector<1x32x64xf32> to vector<32x64xf32>
    %cst_105 = arith.constant dense<0.000000e+00> : vector<16x64xf32>
    %113 = tpu.matmul %110, %112, %cst_105 {dimension_numbers = #tpu.dot_dimension_numbers<[1], [0], [0], [1], [0, 0, 1, 1], [], []>} : vector<16x32xf32>, vector<32x64xf32>, vector<16x64xf32> -> vector<16x64xf32>
    %c0_106 = arith.constant 0 : index
    %c0_107 = arith.constant 0 : index
    %c0_108 = arith.constant 0 : index
    %114 = vector.load %arg10[%c0_106, %c0_107, %c0_108] : memref<2x1x64xf32, #tpu.memory_space<vmem>>, vector<1x1x64xf32>
    %115 = vector.shape_cast %114 : vector<1x1x64xf32> to vector<1x64xf32>
    %116 = vector.broadcast %115 : vector<1x64xf32> to vector<16x64xf32>
    %117 = arith.addf %113, %116 : vector<16x64xf32>
    %cst_109 = arith.constant 0.000000e+00 : f32
    %118 = vector.broadcast %cst_109 : f32 to vector<16x64xf32>
    %119 = arith.maximumf %117, %118 : vector<16x64xf32>
    %c0_110 = arith.constant 0 : index
    %c0_111 = arith.constant 0 : index
    %c0_112 = arith.constant 0 : index
    %120 = vector.load %arg11[%c0_110, %c0_111, %c0_112] : memref<2x64x32xf32, #tpu.memory_space<vmem>>, vector<1x64x32xf32>
    %121 = vector.shape_cast %120 : vector<1x64x32xf32> to vector<64x32xf32>
    %cst_113 = arith.constant dense<0.000000e+00> : vector<16x32xf32>
    %122 = tpu.matmul %119, %121, %cst_113 {dimension_numbers = #tpu.dot_dimension_numbers<[1], [0], [0], [1], [0, 0, 1, 1], [], []>} : vector<16x64xf32>, vector<64x32xf32>, vector<16x32xf32> -> vector<16x32xf32>
    %c0_114 = arith.constant 0 : index
    %c0_115 = arith.constant 0 : index
    %c0_116 = arith.constant 0 : index
    %123 = vector.load %arg12[%c0_114, %c0_115, %c0_116] : memref<2x1x32xf32, #tpu.memory_space<vmem>>, vector<1x1x32xf32>
    %124 = vector.shape_cast %123 : vector<1x1x32xf32> to vector<1x32xf32>
    %125 = vector.broadcast %124 : vector<1x32xf32> to vector<16x32xf32>
    %126 = arith.addf %122, %125 : vector<16x32xf32>
    %127 = arith.addf %126, %110 : vector<16x32xf32>
    %c0_117 = arith.constant 0 : index
    %c0_118 = arith.constant 0 : index
    %c0_119 = arith.constant 0 : index
    %128 = vector.load %arg13[%c0_117, %c0_118, %c0_119] : memref<2x1x32xf32, #tpu.memory_space<vmem>>, vector<1x1x32xf32>
    %129 = vector.shape_cast %128 : vector<1x1x32xf32> to vector<1x32xf32>
    %c0_120 = arith.constant 0 : index
    %c0_121 = arith.constant 0 : index
    %c0_122 = arith.constant 0 : index
    %130 = vector.load %arg14[%c0_120, %c0_121, %c0_122] : memref<2x1x32xf32, #tpu.memory_space<vmem>>, vector<1x1x32xf32>
    %131 = vector.shape_cast %130 : vector<1x1x32xf32> to vector<1x32xf32>
    %cst_123 = arith.constant dense<0.000000e+00> : vector<16xf32>
    %132 = vector.multi_reduction <add>, %127, %cst_123 [1] : vector<16x32xf32> to vector<16xf32>
    %133 = vector.shape_cast %132 : vector<16xf32> to vector<16x1xf32>
    %cst_124 = arith.constant 3.200000e+01 : f32
    %134 = vector.broadcast %cst_124 : f32 to vector<16x1xf32>
    %135 = arith.divf %133, %134 : vector<16x1xf32>
    %136 = vector.broadcast %135 : vector<16x1xf32> to vector<16x32xf32>
    %137 = arith.subf %127, %136 : vector<16x32xf32>
    %138 = arith.mulf %137, %137 : vector<16x32xf32>
    %cst_125 = arith.constant dense<0.000000e+00> : vector<16xf32>
    %139 = vector.multi_reduction <add>, %138, %cst_125 [1] : vector<16x32xf32> to vector<16xf32>
    %140 = vector.shape_cast %139 : vector<16xf32> to vector<16x1xf32>
    %cst_126 = arith.constant 3.200000e+01 : f32
    %141 = vector.broadcast %cst_126 : f32 to vector<16x1xf32>
    %142 = arith.divf %140, %141 : vector<16x1xf32>
    %143 = vector.broadcast %135 : vector<16x1xf32> to vector<16x32xf32>
    %144 = arith.subf %127, %143 : vector<16x32xf32>
    %cst_127 = arith.constant 9.99999974E-6 : f32
    %145 = vector.broadcast %cst_127 : f32 to vector<16x1xf32>
    %146 = arith.addf %142, %145 : vector<16x1xf32>
    %147 = math.rsqrt %146 : vector<16x1xf32>
    %148 = vector.broadcast %147 : vector<16x1xf32> to vector<16x32xf32>
    %149 = arith.mulf %144, %148 : vector<16x32xf32>
    %150 = vector.broadcast %129 : vector<1x32xf32> to vector<16x32xf32>
    %151 = arith.mulf %149, %150 : vector<16x32xf32>
    %152 = vector.broadcast %131 : vector<1x32xf32> to vector<16x32xf32>
    %153 = arith.addf %151, %152 : vector<16x32xf32>
    %154 = tpu.concatenate %35, %74 in 1 : vector<16x16xf32>, vector<16x16xf32> -> vector<16x32xf32>
    %c0_128 = arith.constant 0 : index
    %c0_129 = arith.constant 0 : index
    %155 = vector.load %arg16[%c0_128, %c0_129] : memref<16x64xf32, #tpu.memory_space<vmem>>, vector<16x32xf32>
    tpu.vector_store %arg16[%c0_128, %c0_129], %154 {strides = array<i32>} : memref<16x64xf32, #tpu.memory_space<vmem>>, vector<16x32xf32>,
    %c1_130 = arith.constant 1 : index
    %c0_131 = arith.constant 0 : index
    %c0_132 = arith.constant 0 : index
    %c0_133 = arith.constant 0 : index
    %c0_134 = arith.constant 0 : index
    %156 = vector.load %arg3[%c1_130, %c0_131, %c0_132, %c0_133, %c0_134] : memref<2x3x2x32x16xf32, #tpu.memory_space<vmem>>, vector<1x1x1x32x16xf32>
    %157 = vector.shape_cast %156 : vector<1x1x1x32x16xf32> to vector<32x16xf32>
    %cst_135 = arith.constant dense<0.000000e+00> : vector<16x16xf32>
    %158 = tpu.matmul %153, %157, %cst_135 {dimension_numbers = #tpu.dot_dimension_numbers<[1], [0], [0], [1], [0, 0, 1, 1], [], []>} : vector<16x32xf32>, vector<32x16xf32>, vector<16x16xf32> -> vector<16x16xf32>
    %c1_136 = arith.constant 1 : index
    %c0_137 = arith.constant 0 : index
    %c0_138 = arith.constant 0 : index
    %c0_139 = arith.constant 0 : index
    %c0_140 = arith.constant 0 : index
    %159 = vector.load %arg4[%c1_136, %c0_137, %c0_138, %c0_139, %c0_140] : memref<2x3x2x1x16xf32, #tpu.memory_space<vmem>>, vector<1x1x1x1x16xf32>
    %160 = vector.shape_cast %159 : vector<1x1x1x1x16xf32> to vector<1x16xf32>
    %161 = vector.broadcast %160 : vector<1x16xf32> to vector<16x16xf32>
    %162 = arith.addf %158, %161 : vector<16x16xf32>
    %c1_141 = arith.constant 1 : index
    %c1_142 = arith.constant 1 : index
    %c0_143 = arith.constant 0 : index
    %c0_144 = arith.constant 0 : index
    %c0_145 = arith.constant 0 : index
    %163 = vector.load %arg3[%c1_141, %c1_142, %c0_143, %c0_144, %c0_145] : memref<2x3x2x32x16xf32, #tpu.memory_space<vmem>>, vector<1x1x1x32x16xf32>
    %164 = vector.shape_cast %163 : vector<1x1x1x32x16xf32> to vector<32x16xf32>
    %cst_146 = arith.constant dense<0.000000e+00> : vector<16x16xf32>
    %165 = tpu.matmul %153, %164, %cst_146 {dimension_numbers = #tpu.dot_dimension_numbers<[1], [0], [0], [1], [0, 0, 1, 1], [], []>} : vector<16x32xf32>, vector<32x16xf32>, vector<16x16xf32> -> vector<16x16xf32>
    %c1_147 = arith.constant 1 : index
    %c1_148 = arith.constant 1 : index
    %c0_149 = arith.constant 0 : index
    %c0_150 = arith.constant 0 : index
    %c0_151 = arith.constant 0 : index
    %166 = vector.load %arg4[%c1_147, %c1_148, %c0_149, %c0_150, %c0_151] : memref<2x3x2x1x16xf32, #tpu.memory_space<vmem>>, vector<1x1x1x1x16xf32>
    %167 = vector.shape_cast %166 : vector<1x1x1x1x16xf32> to vector<1x16xf32>
    %168 = vector.broadcast %167 : vector<1x16xf32> to vector<16x16xf32>
    %169 = arith.addf %165, %168 : vector<16x16xf32>
    %c1_152 = arith.constant 1 : index
    %c2_153 = arith.constant 2 : index
    %c0_154 = arith.constant 0 : index
    %c0_155 = arith.constant 0 : index
    %c0_156 = arith.constant 0 : index
    %170 = vector.load %arg3[%c1_152, %c2_153, %c0_154, %c0_155, %c0_156] : memref<2x3x2x32x16xf32, #tpu.memory_space<vmem>>, vector<1x1x1x32x16xf32>
    %171 = vector.shape_cast %170 : vector<1x1x1x32x16xf32> to vector<32x16xf32>
    %cst_157 = arith.constant dense<0.000000e+00> : vector<16x16xf32>
    %172 = tpu.matmul %153, %171, %cst_157 {dimension_numbers = #tpu.dot_dimension_numbers<[1], [0], [0], [1], [0, 0, 1, 1], [], []>} : vector<16x32xf32>, vector<32x16xf32>, vector<16x16xf32> -> vector<16x16xf32>
    %c1_158 = arith.constant 1 : index
    %c2_159 = arith.constant 2 : index
    %c0_160 = arith.constant 0 : index
    %c0_161 = arith.constant 0 : index
    %c0_162 = arith.constant 0 : index
    %173 = vector.load %arg4[%c1_158, %c2_159, %c0_160, %c0_161, %c0_162] : memref<2x3x2x1x16xf32, #tpu.memory_space<vmem>>, vector<1x1x1x1x16xf32>
    %174 = vector.shape_cast %173 : vector<1x1x1x1x16xf32> to vector<1x16xf32>
    %175 = vector.broadcast %174 : vector<1x16xf32> to vector<16x16xf32>
    %176 = arith.addf %172, %175 : vector<16x16xf32>
    %cst_163 = arith.constant dense<0.000000e+00> : vector<16x16xf32>
    %177 = tpu.matmul %162, %169, %cst_163 {dimension_numbers = #tpu.dot_dimension_numbers<[1], [1], [0], [0], [0, 0, 1, 0], [], []>} : vector<16x16xf32>, vector<16x16xf32>, vector<16x16xf32> -> vector<16x16xf32>
    %c0_164 = arith.constant 0 : index
    %c0_165 = arith.constant 0 : index
    %c0_166 = arith.constant 0 : index
    %178 = vector.load %arg2[%c0_164, %c0_165, %c0_166] : memref<2x16x16xf32, #tpu.memory_space<vmem>>, vector<1x16x16xf32>
    %179 = vector.shape_cast %178 : vector<1x16x16xf32> to vector<16x16xf32>
    %180 = arith.addf %177, %179 : vector<16x16xf32>
    %cst_167 = arith.constant dense<0xFF800000> : vector<16xf32>
    %181 = vector.multi_reduction <maximumf>, %180, %cst_167 [1] : vector<16x16xf32> to vector<16xf32>
    %182 = vector.shape_cast %181 : vector<16xf32> to vector<16x1xf32>
    %183 = vector.broadcast %182 : vector<16x1xf32> to vector<16x16xf32>
    %184 = arith.subf %180, %183 : vector<16x16xf32>
    %185 = math.exp %184 : vector<16x16xf32>
    %cst_168 = arith.constant dense<0.000000e+00> : vector<16xf32>
    %186 = vector.multi_reduction <add>, %185, %cst_168 [1] : vector<16x16xf32> to vector<16xf32>
    %187 = vector.shape_cast %186 : vector<16xf32> to vector<16x1xf32>
    %188 = tpu.reciprocal %187 {approx = true} : vector<16x1xf32> -> vector<16x1xf32>
    %189 = vector.broadcast %188 : vector<16x1xf32> to vector<16x16xf32>
    %190 = arith.mulf %185, %189 : vector<16x16xf32>
    %cst_169 = arith.constant dense<0.000000e+00> : vector<16x16xf32>
    %191 = tpu.matmul %190, %176, %cst_169 {dimension_numbers = #tpu.dot_dimension_numbers<[1], [0], [0], [1], [0, 0, 1, 1], [], []>} : vector<16x16xf32>, vector<16x16xf32>, vector<16x16xf32> -> vector<16x16xf32>
    %c1_170 = arith.constant 1 : index
    %c0_171 = arith.constant 0 : index
    %c0_172 = arith.constant 0 : index
    %c0_173 = arith.constant 0 : index
    %192 = vector.load %arg5[%c1_170, %c0_171, %c0_172, %c0_173] : memref<2x2x16x32xf32, #tpu.memory_space<vmem>>, vector<1x1x16x32xf32>
    %193 = vector.shape_cast %192 : vector<1x1x16x32xf32> to vector<16x32xf32>
    %cst_174 = arith.constant dense<0.000000e+00> : vector<16x32xf32>
    %194 = tpu.matmul %191, %193, %cst_174 {dimension_numbers = #tpu.dot_dimension_numbers<[1], [0], [0], [1], [0, 0, 1, 1], [], []>} : vector<16x16xf32>, vector<16x32xf32>, vector<16x32xf32> -> vector<16x32xf32>
    %c1_175 = arith.constant 1 : index
    %c0_176 = arith.constant 0 : index
    %c1_177 = arith.constant 1 : index
    %c0_178 = arith.constant 0 : index
    %c0_179 = arith.constant 0 : index
    %195 = vector.load %arg3[%c1_175, %c0_176, %c1_177, %c0_178, %c0_179] : memref<2x3x2x32x16xf32, #tpu.memory_space<vmem>>, vector<1x1x1x32x16xf32>
    %196 = vector.shape_cast %195 : vector<1x1x1x32x16xf32> to vector<32x16xf32>
    %cst_180 = arith.constant dense<0.000000e+00> : vector<16x16xf32>
    %197 = tpu.matmul %153, %196, %cst_180 {dimension_numbers = #tpu.dot_dimension_numbers<[1], [0], [0], [1], [0, 0, 1, 1], [], []>} : vector<16x32xf32>, vector<32x16xf32>, vector<16x16xf32> -> vector<16x16xf32>
    %c1_181 = arith.constant 1 : index
    %c0_182 = arith.constant 0 : index
    %c1_183 = arith.constant 1 : index
    %c0_184 = arith.constant 0 : index
    %c0_185 = arith.constant 0 : index
    %198 = vector.load %arg4[%c1_181, %c0_182, %c1_183, %c0_184, %c0_185] : memref<2x3x2x1x16xf32, #tpu.memory_space<vmem>>, vector<1x1x1x1x16xf32>
    %199 = vector.shape_cast %198 : vector<1x1x1x1x16xf32> to vector<1x16xf32>
    %200 = vector.broadcast %199 : vector<1x16xf32> to vector<16x16xf32>
    %201 = arith.addf %197, %200 : vector<16x16xf32>
    %c1_186 = arith.constant 1 : index
    %c1_187 = arith.constant 1 : index
    %c1_188 = arith.constant 1 : index
    %c0_189 = arith.constant 0 : index
    %c0_190 = arith.constant 0 : index
    %202 = vector.load %arg3[%c1_186, %c1_187, %c1_188, %c0_189, %c0_190] : memref<2x3x2x32x16xf32, #tpu.memory_space<vmem>>, vector<1x1x1x32x16xf32>
    %203 = vector.shape_cast %202 : vector<1x1x1x32x16xf32> to vector<32x16xf32>
    %cst_191 = arith.constant dense<0.000000e+00> : vector<16x16xf32>
    %204 = tpu.matmul %153, %203, %cst_191 {dimension_numbers = #tpu.dot_dimension_numbers<[1], [0], [0], [1], [0, 0, 1, 1], [], []>} : vector<16x32xf32>, vector<32x16xf32>, vector<16x16xf32> -> vector<16x16xf32>
    %c1_192 = arith.constant 1 : index
    %c1_193 = arith.constant 1 : index
    %c1_194 = arith.constant 1 : index
    %c0_195 = arith.constant 0 : index
    %c0_196 = arith.constant 0 : index
    %205 = vector.load %arg4[%c1_192, %c1_193, %c1_194, %c0_195, %c0_196] : memref<2x3x2x1x16xf32, #tpu.memory_space<vmem>>, vector<1x1x1x1x16xf32>
    %206 = vector.shape_cast %205 : vector<1x1x1x1x16xf32> to vector<1x16xf32>
    %207 = vector.broadcast %206 : vector<1x16xf32> to vector<16x16xf32>
    %208 = arith.addf %204, %207 : vector<16x16xf32>
    %c1_197 = arith.constant 1 : index
    %c2_198 = arith.constant 2 : index
    %c1_199 = arith.constant 1 : index
    %c0_200 = arith.constant 0 : index
    %c0_201 = arith.constant 0 : index
    %209 = vector.load %arg3[%c1_197, %c2_198, %c1_199, %c0_200, %c0_201] : memref<2x3x2x32x16xf32, #tpu.memory_space<vmem>>, vector<1x1x1x32x16xf32>
    %210 = vector.shape_cast %209 : vector<1x1x1x32x16xf32> to vector<32x16xf32>
    %cst_202 = arith.constant dense<0.000000e+00> : vector<16x16xf32>
    %211 = tpu.matmul %153, %210, %cst_202 {dimension_numbers = #tpu.dot_dimension_numbers<[1], [0], [0], [1], [0, 0, 1, 1], [], []>} : vector<16x32xf32>, vector<32x16xf32>, vector<16x16xf32> -> vector<16x16xf32>
    %c1_203 = arith.constant 1 : index
    %c2_204 = arith.constant 2 : index
    %c1_205 = arith.constant 1 : index
    %c0_206 = arith.constant 0 : index
    %c0_207 = arith.constant 0 : index
    %212 = vector.load %arg4[%c1_203, %c2_204, %c1_205, %c0_206, %c0_207] : memref<2x3x2x1x16xf32, #tpu.memory_space<vmem>>, vector<1x1x1x1x16xf32>
    %213 = vector.shape_cast %212 : vector<1x1x1x1x16xf32> to vector<1x16xf32>
    %214 = vector.broadcast %213 : vector<1x16xf32> to vector<16x16xf32>
    %215 = arith.addf %211, %214 : vector<16x16xf32>
    %cst_208 = arith.constant dense<0.000000e+00> : vector<16x16xf32>
    %216 = tpu.matmul %201, %208, %cst_208 {dimension_numbers = #tpu.dot_dimension_numbers<[1], [1], [0], [0], [0, 0, 1, 0], [], []>} : vector<16x16xf32>, vector<16x16xf32>, vector<16x16xf32> -> vector<16x16xf32>
    %c1_209 = arith.constant 1 : index
    %c0_210 = arith.constant 0 : index
    %c0_211 = arith.constant 0 : index
    %217 = vector.load %arg2[%c1_209, %c0_210, %c0_211] : memref<2x16x16xf32, #tpu.memory_space<vmem>>, vector<1x16x16xf32>
    %218 = vector.shape_cast %217 : vector<1x16x16xf32> to vector<16x16xf32>
    %219 = arith.addf %216, %218 : vector<16x16xf32>
    %cst_212 = arith.constant dense<0xFF800000> : vector<16xf32>
    %220 = vector.multi_reduction <maximumf>, %219, %cst_212 [1] : vector<16x16xf32> to vector<16xf32>
    %221 = vector.shape_cast %220 : vector<16xf32> to vector<16x1xf32>
    %222 = vector.broadcast %221 : vector<16x1xf32> to vector<16x16xf32>
    %223 = arith.subf %219, %222 : vector<16x16xf32>
    %224 = math.exp %223 : vector<16x16xf32>
    %cst_213 = arith.constant dense<0.000000e+00> : vector<16xf32>
    %225 = vector.multi_reduction <add>, %224, %cst_213 [1] : vector<16x16xf32> to vector<16xf32>
    %226 = vector.shape_cast %225 : vector<16xf32> to vector<16x1xf32>
    %227 = tpu.reciprocal %226 {approx = true} : vector<16x1xf32> -> vector<16x1xf32>
    %228 = vector.broadcast %227 : vector<16x1xf32> to vector<16x16xf32>
    %229 = arith.mulf %224, %228 : vector<16x16xf32>
    %cst_214 = arith.constant dense<0.000000e+00> : vector<16x16xf32>
    %230 = tpu.matmul %229, %215, %cst_214 {dimension_numbers = #tpu.dot_dimension_numbers<[1], [0], [0], [1], [0, 0, 1, 1], [], []>} : vector<16x16xf32>, vector<16x16xf32>, vector<16x16xf32> -> vector<16x16xf32>
    %c1_215 = arith.constant 1 : index
    %c1_216 = arith.constant 1 : index
    %c0_217 = arith.constant 0 : index
    %c0_218 = arith.constant 0 : index
    %231 = vector.load %arg5[%c1_215, %c1_216, %c0_217, %c0_218] : memref<2x2x16x32xf32, #tpu.memory_space<vmem>>, vector<1x1x16x32xf32>
    %232 = vector.shape_cast %231 : vector<1x1x16x32xf32> to vector<16x32xf32>
    %cst_219 = arith.constant dense<0.000000e+00> : vector<16x32xf32>
    %233 = tpu.matmul %230, %232, %cst_219 {dimension_numbers = #tpu.dot_dimension_numbers<[1], [0], [0], [1], [0, 0, 1, 1], [], []>} : vector<16x16xf32>, vector<16x32xf32>, vector<16x32xf32> -> vector<16x32xf32>
    %234 = arith.addf %194, %233 : vector<16x32xf32>
    %c1_220 = arith.constant 1 : index
    %c0_221 = arith.constant 0 : index
    %c0_222 = arith.constant 0 : index
    %235 = vector.load %arg6[%c1_220, %c0_221, %c0_222] : memref<2x1x32xf32, #tpu.memory_space<vmem>>, vector<1x1x32xf32>
    %236 = vector.shape_cast %235 : vector<1x1x32xf32> to vector<1x32xf32>
    %237 = vector.broadcast %236 : vector<1x32xf32> to vector<16x32xf32>
    %238 = arith.addf %234, %237 : vector<16x32xf32>
    %239 = arith.addf %238, %153 : vector<16x32xf32>
    %c1_223 = arith.constant 1 : index
    %c0_224 = arith.constant 0 : index
    %c0_225 = arith.constant 0 : index
    %240 = vector.load %arg7[%c1_223, %c0_224, %c0_225] : memref<2x1x32xf32, #tpu.memory_space<vmem>>, vector<1x1x32xf32>
    %241 = vector.shape_cast %240 : vector<1x1x32xf32> to vector<1x32xf32>
    %c1_226 = arith.constant 1 : index
    %c0_227 = arith.constant 0 : index
    %c0_228 = arith.constant 0 : index
    %242 = vector.load %arg8[%c1_226, %c0_227, %c0_228] : memref<2x1x32xf32, #tpu.memory_space<vmem>>, vector<1x1x32xf32>
    %243 = vector.shape_cast %242 : vector<1x1x32xf32> to vector<1x32xf32>
    %cst_229 = arith.constant dense<0.000000e+00> : vector<16xf32>
    %244 = vector.multi_reduction <add>, %239, %cst_229 [1] : vector<16x32xf32> to vector<16xf32>
    %245 = vector.shape_cast %244 : vector<16xf32> to vector<16x1xf32>
    %cst_230 = arith.constant 3.200000e+01 : f32
    %246 = vector.broadcast %cst_230 : f32 to vector<16x1xf32>
    %247 = arith.divf %245, %246 : vector<16x1xf32>
    %248 = vector.broadcast %247 : vector<16x1xf32> to vector<16x32xf32>
    %249 = arith.subf %239, %248 : vector<16x32xf32>
    %250 = arith.mulf %249, %249 : vector<16x32xf32>
    %cst_231 = arith.constant dense<0.000000e+00> : vector<16xf32>
    %251 = vector.multi_reduction <add>, %250, %cst_231 [1] : vector<16x32xf32> to vector<16xf32>
    %252 = vector.shape_cast %251 : vector<16xf32> to vector<16x1xf32>
    %cst_232 = arith.constant 3.200000e+01 : f32
    %253 = vector.broadcast %cst_232 : f32 to vector<16x1xf32>
    %254 = arith.divf %252, %253 : vector<16x1xf32>
    %255 = vector.broadcast %247 : vector<16x1xf32> to vector<16x32xf32>
    %256 = arith.subf %239, %255 : vector<16x32xf32>
    %cst_233 = arith.constant 9.99999974E-6 : f32
    %257 = vector.broadcast %cst_233 : f32 to vector<16x1xf32>
    %258 = arith.addf %254, %257 : vector<16x1xf32>
    %259 = math.rsqrt %258 : vector<16x1xf32>
    %260 = vector.broadcast %259 : vector<16x1xf32> to vector<16x32xf32>
    %261 = arith.mulf %256, %260 : vector<16x32xf32>
    %262 = vector.broadcast %241 : vector<1x32xf32> to vector<16x32xf32>
    %263 = arith.mulf %261, %262 : vector<16x32xf32>
    %264 = vector.broadcast %243 : vector<1x32xf32> to vector<16x32xf32>
    %265 = arith.addf %263, %264 : vector<16x32xf32>
    %c1_234 = arith.constant 1 : index
    %c0_235 = arith.constant 0 : index
    %c0_236 = arith.constant 0 : index
    %266 = vector.load %arg9[%c1_234, %c0_235, %c0_236] : memref<2x32x64xf32, #tpu.memory_space<vmem>>, vector<1x32x64xf32>
    %267 = vector.shape_cast %266 : vector<1x32x64xf32> to vector<32x64xf32>
    %cst_237 = arith.constant dense<0.000000e+00> : vector<16x64xf32>
    %268 = tpu.matmul %265, %267, %cst_237 {dimension_numbers = #tpu.dot_dimension_numbers<[1], [0], [0], [1], [0, 0, 1, 1], [], []>} : vector<16x32xf32>, vector<32x64xf32>, vector<16x64xf32> -> vector<16x64xf32>
    %c1_238 = arith.constant 1 : index
    %c0_239 = arith.constant 0 : index
    %c0_240 = arith.constant 0 : index
    %269 = vector.load %arg10[%c1_238, %c0_239, %c0_240] : memref<2x1x64xf32, #tpu.memory_space<vmem>>, vector<1x1x64xf32>
    %270 = vector.shape_cast %269 : vector<1x1x64xf32> to vector<1x64xf32>
    %271 = vector.broadcast %270 : vector<1x64xf32> to vector<16x64xf32>
    %272 = arith.addf %268, %271 : vector<16x64xf32>
    %cst_241 = arith.constant 0.000000e+00 : f32
    %273 = vector.broadcast %cst_241 : f32 to vector<16x64xf32>
    %274 = arith.maximumf %272, %273 : vector<16x64xf32>
    %c1_242 = arith.constant 1 : index
    %c0_243 = arith.constant 0 : index
    %c0_244 = arith.constant 0 : index
    %275 = vector.load %arg11[%c1_242, %c0_243, %c0_244] : memref<2x64x32xf32, #tpu.memory_space<vmem>>, vector<1x64x32xf32>
    %276 = vector.shape_cast %275 : vector<1x64x32xf32> to vector<64x32xf32>
    %cst_245 = arith.constant dense<0.000000e+00> : vector<16x32xf32>
    %277 = tpu.matmul %274, %276, %cst_245 {dimension_numbers = #tpu.dot_dimension_numbers<[1], [0], [0], [1], [0, 0, 1, 1], [], []>} : vector<16x64xf32>, vector<64x32xf32>, vector<16x32xf32> -> vector<16x32xf32>
    %c1_246 = arith.constant 1 : index
    %c0_247 = arith.constant 0 : index
    %c0_248 = arith.constant 0 : index
    %278 = vector.load %arg12[%c1_246, %c0_247, %c0_248] : memref<2x1x32xf32, #tpu.memory_space<vmem>>, vector<1x1x32xf32>
    %279 = vector.shape_cast %278 : vector<1x1x32xf32> to vector<1x32xf32>
    %280 = vector.broadcast %279 : vector<1x32xf32> to vector<16x32xf32>
    %281 = arith.addf %277, %280 : vector<16x32xf32>
    %282 = arith.addf %281, %265 : vector<16x32xf32>
    %c1_249 = arith.constant 1 : index
    %c0_250 = arith.constant 0 : index
    %c0_251 = arith.constant 0 : index
    %283 = vector.load %arg13[%c1_249, %c0_250, %c0_251] : memref<2x1x32xf32, #tpu.memory_space<vmem>>, vector<1x1x32xf32>
    %284 = vector.shape_cast %283 : vector<1x1x32xf32> to vector<1x32xf32>
    %c1_252 = arith.constant 1 : index
    %c0_253 = arith.constant 0 : index
    %c0_254 = arith.constant 0 : index
    %285 = vector.load %arg14[%c1_252, %c0_253, %c0_254] : memref<2x1x32xf32, #tpu.memory_space<vmem>>, vector<1x1x32xf32>
    %286 = vector.shape_cast %285 : vector<1x1x32xf32> to vector<1x32xf32>
    %cst_255 = arith.constant dense<0.000000e+00> : vector<16xf32>
    %287 = vector.multi_reduction <add>, %282, %cst_255 [1] : vector<16x32xf32> to vector<16xf32>
    %288 = vector.shape_cast %287 : vector<16xf32> to vector<16x1xf32>
    %cst_256 = arith.constant 3.200000e+01 : f32
    %289 = vector.broadcast %cst_256 : f32 to vector<16x1xf32>
    %290 = arith.divf %288, %289 : vector<16x1xf32>
    %291 = vector.broadcast %290 : vector<16x1xf32> to vector<16x32xf32>
    %292 = arith.subf %282, %291 : vector<16x32xf32>
    %293 = arith.mulf %292, %292 : vector<16x32xf32>
    %cst_257 = arith.constant dense<0.000000e+00> : vector<16xf32>
    %294 = vector.multi_reduction <add>, %293, %cst_257 [1] : vector<16x32xf32> to vector<16xf32>
    %295 = vector.shape_cast %294 : vector<16xf32> to vector<16x1xf32>
    %cst_258 = arith.constant 3.200000e+01 : f32
    %296 = vector.broadcast %cst_258 : f32 to vector<16x1xf32>
    %297 = arith.divf %295, %296 : vector<16x1xf32>
    %298 = vector.broadcast %290 : vector<16x1xf32> to vector<16x32xf32>
    %299 = arith.subf %282, %298 : vector<16x32xf32>
    %cst_259 = arith.constant 9.99999974E-6 : f32
    %300 = vector.broadcast %cst_259 : f32 to vector<16x1xf32>
    %301 = arith.addf %297, %300 : vector<16x1xf32>
    %302 = math.rsqrt %301 : vector<16x1xf32>
    %303 = vector.broadcast %302 : vector<16x1xf32> to vector<16x32xf32>
    %304 = arith.mulf %299, %303 : vector<16x32xf32>
    %305 = vector.broadcast %284 : vector<1x32xf32> to vector<16x32xf32>
    %306 = arith.mulf %304, %305 : vector<16x32xf32>
    %307 = vector.broadcast %286 : vector<1x32xf32> to vector<16x32xf32>
    %308 = arith.addf %306, %307 : vector<16x32xf32>
    %309 = tpu.concatenate %190, %229 in 1 : vector<16x16xf32>, vector<16x16xf32> -> vector<16x32xf32>
    %c0_260 = arith.constant 0 : index
    %c32 = arith.constant 32 : index
    %310 = vector.load %arg16[%c0_260, %c32] : memref<16x64xf32, #tpu.memory_space<vmem>>, vector<16x32xf32>
    tpu.vector_store %arg16[%c0_260, %c32], %309 {strides = array<i32>} : memref<16x64xf32, #tpu.memory_space<vmem>>, vector<16x32xf32>,
    %c0_261 = arith.constant 0 : index
    %c0_262 = arith.constant 0 : index
    %311 = vector.load %arg15[%c0_261, %c0_262] : memref<16x32xf32, #tpu.memory_space<vmem>>, vector<16x32xf32>
    tpu.vector_store %arg15[%c0_261, %c0_262], %308 {strides = array<i32>} : memref<16x32xf32, #tpu.memory_space<vmem>>, vector<16x32xf32>,
    return
  }
  func.func @transform_0(%arg0: i32) -> (i32, i32) {
    %c0_i32 = arith.constant 0 : i32
    %c0_i32_0 = arith.constant 0 : i32
    %c0_i32_1 = arith.constant 0 : i32
    return %c0_i32, %c0_i32_0 : i32, i32
  }
  func.func @transform_1(%arg0: i32) -> (i32, i32, i32) {
    %c0_i32 = arith.constant 0 : i32
    %c0_i32_0 = arith.constant 0 : i32
    %c0_i32_1 = arith.constant 0 : i32
    %c0_i32_2 = arith.constant 0 : i32
    return %c0_i32, %c0_i32_0, %c0_i32_1 : i32, i32, i32
  }
  func.func @transform_2(%arg0: i32) -> (i32, i32, i32, i32, i32) {
    %c0_i32 = arith.constant 0 : i32
    %c0_i32_0 = arith.constant 0 : i32
    %c0_i32_1 = arith.constant 0 : i32
    %c0_i32_2 = arith.constant 0 : i32
    %c0_i32_3 = arith.constant 0 : i32
    %c0_i32_4 = arith.constant 0 : i32
    return %c0_i32, %c0_i32_0, %c0_i32_1, %c0_i32_2, %c0_i32_3 : i32, i32, i32, i32, i32
  }
  func.func @transform_3(%arg0: i32) -> (i32, i32, i32, i32, i32) {
    %c0_i32 = arith.constant 0 : i32
    %c0_i32_0 = arith.constant 0 : i32
    %c0_i32_1 = arith.constant 0 : i32
    %c0_i32_2 = arith.constant 0 : i32
    %c0_i32_3 = arith.constant 0 : i32
    %c0_i32_4 = arith.constant 0 : i32
    return %c0_i32, %c0_i32_0, %c0_i32_1, %c0_i32_2, %c0_i32_3 : i32, i32, i32, i32, i32
  }
  func.func @transform_4(%arg0: i32) -> (i32, i32, i32, i32) {
    %c0_i32 = arith.constant 0 : i32
    %c0_i32_0 = arith.constant 0 : i32
    %c0_i32_1 = arith.constant 0 : i32
    %c0_i32_2 = arith.constant 0 : i32
    %c0_i32_3 = arith.constant 0 : i32
    return %c0_i32, %c0_i32_0, %c0_i32_1, %c0_i32_2 : i32, i32, i32, i32
  }
  func.func @transform_5(%arg0: i32) -> (i32, i32, i32) {
    %c0_i32 = arith.constant 0 : i32
    %c0_i32_0 = arith.constant 0 : i32
    %c0_i32_1 = arith.constant 0 : i32
    %c0_i32_2 = arith.constant 0 : i32
    return %c0_i32, %c0_i32_0, %c0_i32_1 : i32, i32, i32
  }
  func.func @transform_6(%arg0: i32) -> (i32, i32, i32) {
    %c0_i32 = arith.constant 0 : i32
    %c0_i32_0 = arith.constant 0 : i32
    %c0_i32_1 = arith.constant 0 : i32
    %c0_i32_2 = arith.constant 0 : i32
    return %c0_i32, %c0_i32_0, %c0_i32_1 : i32, i32, i32
  }
  func.func @transform_7(%arg0: i32) -> (i32, i32, i32) {
    %c0_i32 = arith.constant 0 : i32
    %c0_i32_0 = arith.constant 0 : i32
    %c0_i32_1 = arith.constant 0 : i32
    %c0_i32_2 = arith.constant 0 : i32
    return %c0_i32, %c0_i32_0, %c0_i32_1 : i32, i32, i32
  }
  func.func @transform_8(%arg0: i32) -> (i32, i32, i32) {
    %c0_i32 = arith.constant 0 : i32
    %c0_i32_0 = arith.constant 0 : i32
    %c0_i32_1 = arith.constant 0 : i32
    %c0_i32_2 = arith.constant 0 : i32
    return %c0_i32, %c0_i32_0, %c0_i32_1 : i32, i32, i32
  }
  func.func @transform_9(%arg0: i32) -> (i32, i32, i32) {
    %c0_i32 = arith.constant 0 : i32
    %c0_i32_0 = arith.constant 0 : i32
    %c0_i32_1 = arith.constant 0 : i32
    %c0_i32_2 = arith.constant 0 : i32
    return %c0_i32, %c0_i32_0, %c0_i32_1 : i32, i32, i32
  }
  func.func @transform_10(%arg0: i32) -> (i32, i32, i32) {
    %c0_i32 = arith.constant 0 : i32
    %c0_i32_0 = arith.constant 0 : i32
    %c0_i32_1 = arith.constant 0 : i32
    %c0_i32_2 = arith.constant 0 : i32
    return %c0_i32, %c0_i32_0, %c0_i32_1 : i32, i32, i32
  }
  func.func @transform_11(%arg0: i32) -> (i32, i32, i32) {
    %c0_i32 = arith.constant 0 : i32
    %c0_i32_0 = arith.constant 0 : i32
    %c0_i32_1 = arith.constant 0 : i32
    %c0_i32_2 = arith.constant 0 : i32
    return %c0_i32, %c0_i32_0, %c0_i32_1 : i32, i32, i32
  }
  func.func @transform_12(%arg0: i32) -> (i32, i32, i32) {
    %c0_i32 = arith.constant 0 : i32
    %c0_i32_0 = arith.constant 0 : i32
    %c0_i32_1 = arith.constant 0 : i32
    %c0_i32_2 = arith.constant 0 : i32
    return %c0_i32, %c0_i32_0, %c0_i32_1 : i32, i32, i32
  }
  func.func @transform_13(%arg0: i32) -> (i32, i32, i32) {
    %c0_i32 = arith.constant 0 : i32
    %c0_i32_0 = arith.constant 0 : i32
    %c0_i32_1 = arith.constant 0 : i32
    %c0_i32_2 = arith.constant 0 : i32
    return %c0_i32, %c0_i32_0, %c0_i32_1 : i32, i32, i32
  }
  func.func @transform_14(%arg0: i32) -> (i32, i32) {
    %c0_i32 = arith.constant 0 : i32
    %c0_i32_0 = arith.constant 0 : i32
    %c0_i32_1 = arith.constant 0 : i32
    return %c0_i32, %c0_i32_0 : i32, i32
  }
  func.func @transform_15(%arg0: i32) -> (i32, i32) {
    %c0_i32 = arith.constant 0 : i32
    %c0_i32_0 = arith.constant 0 : i32
    %c0_i32_1 = arith.constant 0 : i32
    return %c0_i32, %c0_i32_0 : i32, i32
  }
}

</mosaic_0001>

<llo_original>
// kernel: encoder_forward.1
$region0: #{encoder_forward.1}
  #allocation0 [shape = 'u32[]', space=smem, size = 0x4, offset = 0x4, fixed_abs, tag = 'smem constant byte address 0x4 - core index']
  #allocation1 [shape = 'u32[72,128]{1,0:T(1,128)}', space=vmem, size = 0x9000, scoped, tag = 'internal scratch']
  %s0 = inlined_call_operand.vmem [shape: f32[16,32], index: 0, kind: input, shape index: {}]
  %s1 = inlined_call_operand.vmem [shape: f32[2,16,16], index: 1, kind: input, shape index: {}]
  %s2 = inlined_call_operand.vmem [shape: f32[2,3,2,32,16], index: 2, kind: input, shape index: {}]
  %s3 = inlined_call_operand.vmem [shape: f32[2,3,2,1,16], index: 3, kind: input, shape index: {}]
  %s4 = inlined_call_operand.vmem [shape: f32[2,2,16,32], index: 4, kind: input, shape index: {}]
  %s5 = inlined_call_operand.vmem [shape: f32[2,1,32], index: 5, kind: input, shape index: {}]
  %s6 = inlined_call_operand.vmem [shape: f32[2,1,32], index: 6, kind: input, shape index: {}]
  %s7 = inlined_call_operand.vmem [shape: f32[2,1,32], index: 7, kind: input, shape index: {}]
  %s8 = inlined_call_operand.vmem [shape: f32[2,32,64], index: 8, kind: input, shape index: {}]
  %s9 = inlined_call_operand.vmem [shape: f32[2,1,64], index: 9, kind: input, shape index: {}]
  %s10 = inlined_call_operand.vmem [shape: f32[2,64,32], index: 10, kind: input, shape index: {}]
  %s11 = inlined_call_operand.vmem [shape: f32[2,1,32], index: 11, kind: input, shape index: {}]
  %s12 = inlined_call_operand.vmem [shape: f32[2,1,32], index: 12, kind: input, shape index: {}]
  %s13 = inlined_call_operand.vmem [shape: f32[2,1,32], index: 13, kind: input, shape index: {}]
  %s14 = inlined_call_operand.hbm [shape: f32[16,32], index: 14, kind: output, shape index: {0}]
  %s15 = inlined_call_operand.vmem [shape: f32[16,64], index: 15, kind: output, shape index: {1}]
  %16 = xla_tuple %s14, %s15
  %s17 = sld [smem:[#allocation0]]
  $region74: #{encoder_forward.1} parent=0
    _
  %s19 = ssub.s32 1, %s17
  %s20 = scalar_select 0, %s19, %s17
  $region1: #{encoder_forward.1} parent=0
    #allocation2 [shape = 'u8[8192]{0}', space=vmem, size = 0x2000, scoped, tag = 'output window, operand 0, single buffered']
    #allocation3 [shape = 's32[1]{0}', space=sflag, size = 0x4, scoped, tag = 'scoped memory for encoder_forward.1']
    %21 = vsyncpa [#allocation3], 0
    // Predicated region
    $region2: #{encoder_forward.1} parent=1 // pred_check
      _
    $region3: #{encoder_forward.1} parent=1 // pred_check_branch
      %23 = sbr.rel (0) target = $region5
    $region4: #{encoder_forward.1} parent=1 // pred_region
      _
    $region5: #{encoder_forward.1} parent=1 // pred_fallthru
      _
    // Predicated region
    $region6: #{encoder_forward.1} parent=1 // pred_check
      _
    $region7: #{encoder_forward.1} parent=1 // pred_check_branch
      %25 = sbr.rel (0) target = $region9
    $region8: #{encoder_forward.1} parent=1 // pred_region
      _
    $region9: #{encoder_forward.1} parent=1 // pred_fallthru
      _
    // Predicated region
    $region10: #{encoder_forward.1} parent=1 // pred_check
      _
    $region11: #{encoder_forward.1} parent=1 // pred_check_branch
      %27 = sbr.rel (0) target = $region13
    $region12: #{encoder_forward.1} parent=1 // pred_region
      _
    $region13: #{encoder_forward.1} parent=1 // pred_fallthru
      _
    // Predicated region
    $region14: #{encoder_forward.1} parent=1 // pred_check
      _
    $region15: #{encoder_forward.1} parent=1 // pred_check_branch
      %29 = sbr.rel (0) target = $region17
    $region16: #{encoder_forward.1} parent=1 // pred_region
      _
    $region17: #{encoder_forward.1} parent=1 // pred_fallthru
      _
    // Predicated region
    $region18: #{encoder_forward.1} parent=1 // pred_check
      _
    $region19: #{encoder_forward.1} parent=1 // pred_check_branch
      %31 = sbr.rel (0) target = $region21
    $region20: #{encoder_forward.1} parent=1 // pred_region
      _
    $region21: #{encoder_forward.1} parent=1 // pred_fallthru
      _
    // Predicated region
    $region22: #{encoder_forward.1} parent=1 // pred_check
      _
    $region23: #{encoder_forward.1} parent=1 // pred_check_branch
      %33 = sbr.rel (0) target = $region25
    $region24: #{encoder_forward.1} parent=1 // pred_region
      _
    $region25: #{encoder_forward.1} parent=1 // pred_fallthru
      _
    // Predicated region
    $region26: #{encoder_forward.1} parent=1 // pred_check
      _
    $region27: #{encoder_forward.1} parent=1 // pred_check_branch
      %35 = sbr.rel (0) target = $region29
    $region28: #{encoder_forward.1} parent=1 // pred_region
      _
    $region29: #{encoder_forward.1} parent=1 // pred_fallthru
      _
    // Predicated region
    $region30: #{encoder_forward.1} parent=1 // pred_check
      _
    $region31: #{encoder_forward.1} parent=1 // pred_check_branch
      %37 = sbr.rel (0) target = $region33
    $region32: #{encoder_forward.1} parent=1 // pred_region
      _
    $region33: #{encoder_forward.1} parent=1 // pred_fallthru
      _
    // Predicated region
    $region34: #{encoder_forward.1} parent=1 // pred_check
      _
    $region35: #{encoder_forward.1} parent=1 // pred_check_branch
      %39 = sbr.rel (0) target = $region37
    $region36: #{encoder_forward.1} parent=1 // pred_region
      _
    $region37: #{encoder_forward.1} parent=1 // pred_fallthru
      _
    // Predicated region
    $region38: #{encoder_forward.1} parent=1 // pred_check
      _
    $region39: #{encoder_forward.1} parent=1 // pred_check_branch
      %41 = sbr.rel (0) target = $region41
    $region40: #{encoder_forward.1} parent=1 // pred_region
      _
    $region41: #{encoder_forward.1} parent=1 // pred_fallthru
      _
    // Predicated region
    $region42: #{encoder_forward.1} parent=1 // pred_check
      _
    $region43: #{encoder_forward.1} parent=1 // pred_check_branch
      %43 = sbr.rel (0) target = $region45
    $region44: #{encoder_forward.1} parent=1 // pred_region
      _
    $region45: #{encoder_forward.1} parent=1 // pred_fallthru
      _
    // Predicated region
    $region46: #{encoder_forward.1} parent=1 // pred_check
      _
    $region47: #{encoder_forward.1} parent=1 // pred_check_branch
      %45 = sbr.rel (0) target = $region49
    $region48: #{encoder_forward.1} parent=1 // pred_region
      _
    $region49: #{encoder_forward.1} parent=1 // pred_fallthru
      _
    // Predicated region
    $region50: #{encoder_forward.1} parent=1 // pred_check
      _
    $region51: #{encoder_forward.1} parent=1 // pred_check_branch
      %47 = sbr.rel (0) target = $region53
    $region52: #{encoder_forward.1} parent=1 // pred_region
      _
    $region53: #{encoder_forward.1} parent=1 // pred_fallthru
      _
    // Predicated region
    $region54: #{encoder_forward.1} parent=1 // pred_check
      _
    $region55: #{encoder_forward.1} parent=1 // pred_check_branch
      %49 = sbr.rel (0) target = $region57
    $region56: #{encoder_forward.1} parent=1 // pred_region
      _
    $region57: #{encoder_forward.1} parent=1 // pred_fallthru
      _
    %v50 = vld [vmem:[%s0] sm:$0xff]
    %v51 = vld [vmem:[%s0 + $0x8] sm:$0xff]
    %v52 = vld [vmem:[%s2] sm:$0xff]
    %v53 = vld [vmem:[%s2 + $0x8] sm:$0xff]
    %v54 = vld [vmem:[%s2 + $0x10] sm:$0xff]
    %v55 = vld [vmem:[%s2 + $0x18] sm:$0xff]
    %v56 = vld [vmem:[%s3] sm:$0x1]
    %v58 = vperm.slane %v56, 0
    %vm60 = vcmask 261120
    %v62 = vsel %vm60, %v50, 0
    %v65 = vsel %vm60, %v51, 0
    %67 = vmatpush.msra.mxu0 0.0
    %68 = vmatpush.msra.mxu0 0.0
    %69 = vmatpush.msra.mxu0 0.0
    %70 = vmatpush.msra.mxu0 0.0
    %71 = vmatpush.msra.mxu0 0.0
    %72 = vmatpush.msra.mxu0 0.0
    %73 = vmatpush.msra.mxu0 0.0
    %74 = vmatpush.msra.mxu0 0.0
    %75 = vmatpush.msra.mxu0 0.0
    %76 = vmatpush.msra.mxu0 0.0
    %77 = vmatpush.msra.mxu0 0.0
    %78 = vmatpush.msra.mxu0 0.0
    %79 = vmatpush.msra.mxu0 %v55
    %80 = vmatpush.msra.mxu0 %v54
    %81 = vmatpush.msra.mxu0 %v53
    %82 = vmatpush.msra.mxu0 %v52
    %83 = vmatmul.f32.gmra.mxu0 %v62
    %v84 = vpop.f32.mrf.mxu0
    %v85 = vadd.f32 %v58, %v84
    %86 = vmatmul.f32.gmra.mxu0 %v65
    %v87 = vpop.f32.mrf.mxu0
    %v88 = vadd.f32 %v58, %v87
    %89 = vdwg.mxu0
    %s90 = scalar_lea.vmem %s2, 64
    %v91 = vld [vmem:[%s90] sm:$0xff]
    %v92 = vld [vmem:[%s90 + $0x8] sm:$0xff]
    %v93 = vld [vmem:[%s90 + $0x10] sm:$0xff]
    %v94 = vld [vmem:[%s90 + $0x18] sm:$0xff]
    %s95 = scalar_lea.vmem %s3, 2
    %v96 = vld [vmem:[%s95] sm:$0x1]
    %v98 = vperm.slane %v96, 0
    %100 = vmatpush.msra.mxu0 0.0
    %101 = vmatpush.msra.mxu0 0.0
    %102 = vmatpush.msra.mxu0 0.0
    %103 = vmatpush.msra.mxu0 0.0
    %104 = vmatpush.msra.mxu0 0.0
    %105 = vmatpush.msra.mxu0 0.0
    %106 = vmatpush.msra.mxu0 0.0
    %107 = vmatpush.msra.mxu0 0.0
    %108 = vmatpush.msra.mxu0 0.0
    %109 = vmatpush.msra.mxu0 0.0
    %110 = vmatpush.msra.mxu0 0.0
    %111 = vmatpush.msra.mxu0 0.0
    %112 = vmatpush.msra.mxu0 %v94
    %113 = vmatpush.msra.mxu0 %v93
    %114 = vmatpush.msra.mxu0 %v92
    %115 = vmatpush.msra.mxu0 %v91
    %116 = vmatmul.f32.gmra.mxu0 %v62
    %v117 = vpop.f32.mrf.mxu0
    %v118 = vadd.f32 %v98, %v117
    %119 = vmatmul.f32.gmra.mxu0 %v65
    %v120 = vpop.f32.mrf.mxu0
    %v121 = vadd.f32 %v98, %v120
    %122 = vdwg.mxu0
    %s123 = scalar_lea.vmem %s2, 128
    %v124 = vld [vmem:[%s123] sm:$0xff]
    %v125 = vld [vmem:[%s123 + $0x8] sm:$0xff]
    %v126 = vld [vmem:[%s123 + $0x10] sm:$0xff]
    %v127 = vld [vmem:[%s123 + $0x18] sm:$0xff]
    %s128 = scalar_lea.vmem %s3, 4
    %v129 = vld [vmem:[%s128] sm:$0x1]
    %v131 = vperm.slane %v129, 0
    %133 = vmatpush.msra.mxu0 0.0
    %134 = vmatpush.msra.mxu0 0.0
    %135 = vmatpush.msra.mxu0 0.0
    %136 = vmatpush.msra.mxu0 0.0
    %137 = vmatpush.msra.mxu0 0.0
    %138 = vmatpush.msra.mxu0 0.0
    %139 = vmatpush.msra.mxu0 0.0
    %140 = vmatpush.msra.mxu0 0.0
    %141 = vmatpush.msra.mxu0 0.0
    %142 = vmatpush.msra.mxu0 0.0
    %143 = vmatpush.msra.mxu0 0.0
    %144 = vmatpush.msra.mxu0 0.0
    %145 = vmatpush.msra.mxu0 %v127
    %146 = vmatpush.msra.mxu0 %v126
    %147 = vmatpush.msra.mxu0 %v125
    %148 = vmatpush.msra.mxu0 %v124
    %149 = vmatmul.f32.gmra.mxu0 %v62
    %v150 = vpop.f32.mrf.mxu0
    %v151 = vadd.f32 %v131, %v150
    %152 = vmatmul.f32.gmra.mxu0 %v65
    %v153 = vpop.f32.mrf.mxu0
    %v154 = vadd.f32 %v131, %v153
    %155 = vdwg.mxu0
    %v156 = vld [vmem:[%s1] sm:$0xff]
    %v157 = vld [vmem:[%s1 + $0x8] sm:$0xff]
    %vm158 = vcmask 130048
    %v160 = vsel %vm158, %v85, 0
    %v163 = vsel %vm158, %v88, 0
    %v166 = vsel %vm158, %v118, 0
    %v169 = vsel %vm158, %v121, 0
    %171 = vmatpush.xpose.msra.mxu0 0.0
    %172 = vmatpush.xpose.msra.mxu0 0.0
    %173 = vmatpush.xpose.msra.mxu0 0.0
    %174 = vmatpush.xpose.msra.mxu0 0.0
    %175 = vmatpush.xpose.msra.mxu0 0.0
    %176 = vmatpush.xpose.msra.mxu0 0.0
    %177 = vmatpush.xpose.msra.mxu0 0.0
    %178 = vmatpush.xpose.msra.mxu0 0.0
    %179 = vmatpush.xpose.msra.mxu0 0.0
    %180 = vmatpush.xpose.msra.mxu0 0.0
    %181 = vmatpush.xpose.msra.mxu0 0.0
    %182 = vmatpush.xpose.msra.mxu0 0.0
    %183 = vmatpush.xpose.msra.mxu0 0.0
    %184 = vmatpush.xpose.msra.mxu0 0.0
    %185 = vmatpush.xpose.msra.mxu0 %v169
    %186 = vmatpush.xpose.msra.mxu0 %v166
    %187 = vmatmul.f32.gmra.mxu0 %v160
    %v188 = vpop.f32.mrf.mxu0
    %v189 = vadd.f32 %v156, %v188
    %190 = vmatmul.f32.gmra.mxu0 %v163
    %v191 = vpop.f32.mrf.mxu0
    %v192 = vadd.f32 %v157, %v191
    %193 = vdwg.mxu0
    %v194 = vsel %vm158, %v189, -inf
    %195 = vmax.xlane.f32.xlu0 %v194
    %v196 = vpop.xlane.xlu0 %195
    %v197 = vsel %vm158, %v192, -inf
    %198 = vmax.xlane.f32.xlu0 %v197
    %v199 = vpop.xlane.xlu0 %198
    %v200 = vsub.f32 %v189, %v196
    %v201 = vsub.f32 %v192, %v199
    %v202 = vmul.f32 %v200, 1.442695
    %v203 = vpow.pop %v202
    %v204 = vmul.f32 %v201, 1.442695
    %v205 = vpow.pop %v204
    %v206 = vsel %vm158, %v203, 0.0
    %207 = vadd.xlane.f32.xlu0 %v206
    %v208 = vpop.xlane.xlu0 %207
    %v209 = vsel %vm158, %v205, 0.0
    %210 = vadd.xlane.f32.xlu0 %v209
    %v211 = vpop.xlane.xlu0 %210
    %v212 = vrcp.pop %v208
    %v213 = vrcp.pop %v211
    %v214 = vmul.f32 %v203, %v212
    %v215 = vmul.f32 %v205, %v213
    %v217 = vsel %vm158, %v214, 0
    %v220 = vsel %vm158, %v215, 0
    %222 = vmatpush.msra.mxu0 0.0
    %223 = vmatpush.msra.mxu0 0.0
    %224 = vmatpush.msra.mxu0 0.0
    %225 = vmatpush.msra.mxu0 0.0
    %226 = vmatpush.msra.mxu0 0.0
    %227 = vmatpush.msra.mxu0 0.0
    %228 = vmatpush.msra.mxu0 0.0
    %229 = vmatpush.msra.mxu0 0.0
    %230 = vmatpush.msra.mxu0 0.0
    %231 = vmatpush.msra.mxu0 0.0
    %232 = vmatpush.msra.mxu0 0.0
    %233 = vmatpush.msra.mxu0 0.0
    %234 = vmatpush.msra.mxu0 0.0
    %235 = vmatpush.msra.mxu0 0.0
    %236 = vmatpush.msra.mxu0 %v154
    %237 = vmatpush.msra.mxu0 %v151
    %238 = vmatmul.f32.gmra.mxu0 %v217
    %v239 = vpop.f32.mrf.mxu0
    %v240 = vadd.f32 0.0, %v239
    %241 = vmatmul.f32.gmra.mxu0 %v220
    %v242 = vpop.f32.mrf.mxu0
    %v243 = vadd.f32 0.0, %v242
    %244 = vdwg.mxu0
    %v245 = vld [vmem:[%s4] sm:$0xff]
    %v246 = vld [vmem:[%s4 + $0x8] sm:$0xff]
    %s247 = scalar_lea.vmem %s2, 32
    %v248 = vld [vmem:[%s247] sm:$0xff]
    %v249 = vld [vmem:[%s247 + $0x8] sm:$0xff]
    %v250 = vld [vmem:[%s247 + $0x10] sm:$0xff]
    %v251 = vld [vmem:[%s247 + $0x18] sm:$0xff]
    %s252 = scalar_lea.vmem %s3, 1
    %v253 = vld [vmem:[%s252] sm:$0x1]
    %v255 = vperm.slane %v253, 0
    %257 = vmatpush.msra.mxu0 0.0
    %258 = vmatpush.msra.mxu0 0.0
    %259 = vmatpush.msra.mxu0 0.0
    %260 = vmatpush.msra.mxu0 0.0
    %261 = vmatpush.msra.mxu0 0.0
    %262 = vmatpush.msra.mxu0 0.0
    %263 = vmatpush.msra.mxu0 0.0
    %264 = vmatpush.msra.mxu0 0.0
    %265 = vmatpush.msra.mxu0 0.0
    %266 = vmatpush.msra.mxu0 0.0
    %267 = vmatpush.msra.mxu0 0.0
    %268 = vmatpush.msra.mxu0 0.0
    %269 = vmatpush.msra.mxu0 %v251
    %270 = vmatpush.msra.mxu0 %v250
    %271 = vmatpush.msra.mxu0 %v249
    %272 = vmatpush.msra.mxu0 %v248
    %273 = vmatmul.f32.gmra.mxu0 %v62
    %v274 = vpop.f32.mrf.mxu0
    %v275 = vadd.f32 %v255, %v274
    %276 = vmatmul.f32.gmra.mxu0 %v65
    %v277 = vpop.f32.mrf.mxu0
    %v278 = vadd.f32 %v255, %v277
    %279 = vdwg.mxu0
    %s280 = scalar_lea.vmem %s2, 96
    %v281 = vld [vmem:[%s280] sm:$0xff]
    %v282 = vld [vmem:[%s280 + $0x8] sm:$0xff]
    %v283 = vld [vmem:[%s280 + $0x10] sm:$0xff]
    %v284 = vld [vmem:[%s280 + $0x18] sm:$0xff]
    %s285 = scalar_lea.vmem %s3, 3
    %v286 = vld [vmem:[%s285] sm:$0x1]
    %v288 = vperm.slane %v286, 0
    %290 = vmatpush.msra.mxu0 0.0
    %291 = vmatpush.msra.mxu0 0.0
    %292 = vmatpush.msra.mxu0 0.0
    %293 = vmatpush.msra.mxu0 0.0
    %294 = vmatpush.msra.mxu0 0.0
    %295 = vmatpush.msra.mxu0 0.0
    %296 = vmatpush.msra.mxu0 0.0
    %297 = vmatpush.msra.mxu0 0.0
    %298 = vmatpush.msra.mxu0 0.0
    %299 = vmatpush.msra.mxu0 0.0
    %300 = vmatpush.msra.mxu0 0.0
    %301 = vmatpush.msra.mxu0 0.0
    %302 = vmatpush.msra.mxu0 %v284
    %303 = vmatpush.msra.mxu0 %v283
    %304 = vmatpush.msra.mxu0 %v282
    %305 = vmatpush.msra.mxu0 %v281
    %306 = vmatmul.f32.gmra.mxu0 %v62
    %v307 = vpop.f32.mrf.mxu0
    %v308 = vadd.f32 %v288, %v307
    %309 = vmatmul.f32.gmra.mxu0 %v65
    %v310 = vpop.f32.mrf.mxu0
    %v311 = vadd.f32 %v288, %v310
    %312 = vdwg.mxu0
    %s313 = scalar_lea.vmem %s2, 160
    %v314 = vld [vmem:[%s313] sm:$0xff]
    %v315 = vld [vmem:[%s313 + $0x8] sm:$0xff]
    %v316 = vld [vmem:[%s313 + $0x10] sm:$0xff]
    %v317 = vld [vmem:[%s313 + $0x18] sm:$0xff]
    %s318 = scalar_lea.vmem %s3, 5
    %v319 = vld [vmem:[%s318] sm:$0x1]
    %v321 = vperm.slane %v319, 0
    %323 = vmatpush.msra.mxu0 0.0
    %324 = vmatpush.msra.mxu0 0.0
    %325 = vmatpush.msra.mxu0 0.0
    %326 = vmatpush.msra.mxu0 0.0
    %327 = vmatpush.msra.mxu0 0.0
    %328 = vmatpush.msra.mxu0 0.0
    %329 = vmatpush.msra.mxu0 0.0
    %330 = vmatpush.msra.mxu0 0.0
    %331 = vmatpush.msra.mxu0 0.0
    %332 = vmatpush.msra.mxu0 0.0
    %333 = vmatpush.msra.mxu0 0.0
    %334 = vmatpush.msra.mxu0 0.0
    %335 = vmatpush.msra.mxu0 %v317
    %336 = vmatpush.msra.mxu0 %v316
    %337 = vmatpush.msra.mxu0 %v315
    %338 = vmatpush.msra.mxu0 %v314
    %339 = vmatmul.f32.gmra.mxu0 %v62
    %v340 = vpop.f32.mrf.mxu0
    %v341 = vadd.f32 %v321, %v340
    %342 = vmatmul.f32.gmra.mxu0 %v65
    %v343 = vpop.f32.mrf.mxu0
    %v344 = vadd.f32 %v321, %v343
    %345 = vdwg.mxu0
    %s346 = scalar_lea.vmem %s1, 16
    %v347 = vld [vmem:[%s346] sm:$0xff]
    %v348 = vld [vmem:[%s346 + $0x8] sm:$0xff]
    %v350 = vsel %vm158, %v275, 0
    %v353 = vsel %vm158, %v278, 0
    %v356 = vsel %vm158, %v308, 0
    %v359 = vsel %vm158, %v311, 0
    %361 = vmatpush.xpose.msra.mxu0 0.0
    %362 = vmatpush.xpose.msra.mxu0 0.0
    %363 = vmatpush.xpose.msra.mxu0 0.0
    %364 = vmatpush.xpose.msra.mxu0 0.0
    %365 = vmatpush.xpose.msra.mxu0 0.0
    %366 = vmatpush.xpose.msra.mxu0 0.0
    %367 = vmatpush.xpose.msra.mxu0 0.0
    %368 = vmatpush.xpose.msra.mxu0 0.0
    %369 = vmatpush.xpose.msra.mxu0 0.0
    %370 = vmatpush.xpose.msra.mxu0 0.0
    %371 = vmatpush.xpose.msra.mxu0 0.0
    %372 = vmatpush.xpose.msra.mxu0 0.0
    %373 = vmatpush.xpose.msra.mxu0 0.0
    %374 = vmatpush.xpose.msra.mxu0 0.0
    %375 = vmatpush.xpose.msra.mxu0 %v359
    %376 = vmatpush.xpose.msra.mxu0 %v356
    %377 = vmatmul.f32.gmra.mxu0 %v350
    %v378 = vpop.f32.mrf.mxu0
    %v379 = vadd.f32 %v347, %v378
    %380 = vmatmul.f32.gmra.mxu0 %v353
    %v381 = vpop.f32.mrf.mxu0
    %v382 = vadd.f32 %v348, %v381
    %383 = vdwg.mxu0
    %v384 = vsel %vm158, %v379, -inf
    %385 = vmax.xlane.f32.xlu0 %v384
    %v386 = vpop.xlane.xlu0 %385
    %v387 = vsel %vm158, %v382, -inf
    %388 = vmax.xlane.f32.xlu0 %v387
    %v389 = vpop.xlane.xlu0 %388
    %v390 = vsub.f32 %v379, %v386
    %v391 = vsub.f32 %v382, %v389
    %v392 = vmul.f32 %v390, 1.442695
    %v393 = vpow.pop %v392
    %v394 = vmul.f32 %v391, 1.442695
    %v395 = vpow.pop %v394
    %v396 = vsel %vm158, %v393, 0.0
    %397 = vadd.xlane.f32.xlu0 %v396
    %v398 = vpop.xlane.xlu0 %397
    %v399 = vsel %vm158, %v395, 0.0
    %400 = vadd.xlane.f32.xlu0 %v399
    %v401 = vpop.xlane.xlu0 %400
    %v402 = vrcp.pop %v398
    %v403 = vrcp.pop %v401
    %v404 = vmul.f32 %v393, %v402
    %v405 = vmul.f32 %v395, %v403
    %v407 = vsel %vm158, %v404, 0
    %v410 = vsel %vm158, %v405, 0
    %412 = vmatpush.msra.mxu0 0.0
    %413 = vmatpush.msra.mxu0 0.0
    %414 = vmatpush.msra.mxu0 0.0
    %415 = vmatpush.msra.mxu0 0.0
    %416 = vmatpush.msra.mxu0 0.0
    %417 = vmatpush.msra.mxu0 0.0
    %418 = vmatpush.msra.mxu0 0.0
    %419 = vmatpush.msra.mxu0 0.0
    %420 = vmatpush.msra.mxu0 0.0
    %421 = vmatpush.msra.mxu0 0.0
    %422 = vmatpush.msra.mxu0 0.0
    %423 = vmatpush.msra.mxu0 0.0
    %424 = vmatpush.msra.mxu0 0.0
    %425 = vmatpush.msra.mxu0 0.0
    %426 = vmatpush.msra.mxu0 %v344
    %427 = vmatpush.msra.mxu0 %v341
    %428 = vmatmul.f32.gmra.mxu0 %v407
    %v429 = vpop.f32.mrf.mxu0
    %v430 = vadd.f32 0.0, %v429
    %431 = vmatmul.f32.gmra.mxu0 %v410
    %v432 = vpop.f32.mrf.mxu0
    %v433 = vadd.f32 0.0, %v432
    %434 = vdwg.mxu0
    %s435 = scalar_lea.vmem %s4, 16
    %v436 = vld [vmem:[%s435] sm:$0xff]
    %v437 = vld [vmem:[%s435 + $0x8] sm:$0xff]
    %v439 = vsel %vm158, %v430, 0
    %v442 = vsel %vm158, %v433, 0
    %444 = vmatpush.msra.mxu0 0.0
    %445 = vmatpush.msra.mxu0 0.0
    %446 = vmatpush.msra.mxu0 0.0
    %447 = vmatpush.msra.mxu0 0.0
    %448 = vmatpush.msra.mxu0 0.0
    %449 = vmatpush.msra.mxu0 0.0
    %450 = vmatpush.msra.mxu0 0.0
    %451 = vmatpush.msra.mxu0 0.0
    %452 = vmatpush.msra.mxu0 0.0
    %453 = vmatpush.msra.mxu0 0.0
    %454 = vmatpush.msra.mxu0 0.0
    %455 = vmatpush.msra.mxu0 0.0
    %456 = vmatpush.msra.mxu0 0.0
    %457 = vmatpush.msra.mxu0 0.0
    %458 = vmatpush.msra.mxu0 %v437
    %459 = vmatpush.msra.mxu0 %v436
    %460 = vmatmul.f32.gmra.mxu0 %v439
    %v461 = vpop.f32.mrf.mxu0
    %v462 = vadd.f32 0.0, %v461
    %463 = vmatmul.f32.gmra.mxu0 %v442
    %v464 = vpop.f32.mrf.mxu0
    %v465 = vadd.f32 0.0, %v464
    %466 = vdwg.mxu0
    %v468 = vsel %vm158, %v240, 0
    %v471 = vsel %vm158, %v243, 0
    %473 = vmatpush.msra.mxu0 0.0
    %474 = vmatpush.msra.mxu0 0.0
    %475 = vmatpush.msra.mxu0 0.0
    %476 = vmatpush.msra.mxu0 0.0
    %477 = vmatpush.msra.mxu0 0.0
    %478 = vmatpush.msra.mxu0 0.0
    %479 = vmatpush.msra.mxu0 0.0
    %480 = vmatpush.msra.mxu0 0.0
    %481 = vmatpush.msra.mxu0 0.0
    %482 = vmatpush.msra.mxu0 0.0
    %483 = vmatpush.msra.mxu0 0.0
    %484 = vmatpush.msra.mxu0 0.0
    %485 = vmatpush.msra.mxu0 0.0
    %486 = vmatpush.msra.mxu0 0.0
    %487 = vmatpush.msra.mxu0 %v246
    %488 = vmatpush.msra.mxu0 %v245
    %489 = vmatmul.f32.gmra.mxu0 %v468
    %v490 = vpop.f32.mrf.mxu0
    %v491 = vadd.f32 %v462, %v490
    %492 = vmatmul.f32.gmra.mxu0 %v471
    %v493 = vpop.f32.mrf.mxu0
    %v494 = vadd.f32 %v465, %v493
    %495 = vdwg.mxu0
    %v496 = vld [vmem:[%s5] sm:$0x1]
    %v498 = vperm.slane %v496, 0
    %v500 = vadd.f32 %v491, %v498
    %v501 = vadd.f32 %v494, %v498
    %v502 = vadd.f32 %v500, %v50
    %v503 = vadd.f32 %v501, %v51
    %v504 = vld [vmem:[%s6] sm:$0x1]
    %v505 = vld [vmem:[%s7] sm:$0x1]
    %v506 = vsel %vm60, %v502, 0.0
    %507 = vadd.xlane.f32.xlu0 %v506
    %v508 = vpop.xlane.xlu0 %507
    %v509 = vsel %vm60, %v503, 0.0
    %510 = vadd.xlane.f32.xlu0 %v509
    %v511 = vpop.xlane.xlu0 %510
    %v512 = vrcp.pop 32.0
    %v513 = vmul.f32 32.0, %v512
    %v514 = vsub.f32 1.0, %v513
    %v515 = vmul.f32 %v512, %v514
    %v516 = vadd.f32 %v512, %v515
    %vm517 = vweird.f32 %v512
    %v518 = vsel %vm517, %v512, %v516
    %v519 = vmul.f32 %v508, %v518
    %v520 = vmul.f32 %v511, %v518
    %v521 = vsub.f32 %v502, %v519
    %v522 = vsub.f32 %v503, %v520
    %v523 = vmul.f32 %v521, %v521
    %v524 = vmul.f32 %v522, %v522
    %v525 = vsel %vm60, %v523, 0.0
    %526 = vadd.xlane.f32.xlu0 %v525
    %v527 = vpop.xlane.xlu0 %526
    %v528 = vsel %vm60, %v524, 0.0
    %529 = vadd.xlane.f32.xlu0 %v528
    %v530 = vpop.xlane.xlu0 %529
    %v531 = vmul.f32 %v527, %v518
    %v532 = vmul.f32 %v530, %v518
    %v533 = vadd.f32 %v531, 1e-05
    %v534 = vadd.f32 %v532, 1e-05
    %v535 = vrsqrt.pop %v533
    %v536 = vmul.f32 %v535, %v533
    %v537 = vmul.f32 %v536, %v535
    %v538 = vmul.f32 0.5, %v537
    %v539 = vsub.f32 1.5, %v538
    %v540 = vmul.f32 %v535, %v539
    %vm541 = vweird.f32 %v533
    %vm542 = vweird.f32 %v535
    %vm543 = vmor %vm541, %vm542
    %v544 = vsel %vm543, %v535, %v540
    %v545 = vrsqrt.pop %v534
    %v546 = vmul.f32 %v545, %v534
    %v547 = vmul.f32 %v546, %v545
    %v548 = vmul.f32 0.5, %v547
    %v549 = vsub.f32 1.5, %v548
    %v550 = vmul.f32 %v545, %v549
    %vm551 = vweird.f32 %v534
    %vm552 = vweird.f32 %v545
    %vm553 = vmor %vm551, %vm552
    %v554 = vsel %vm553, %v545, %v550
    %v555 = vmul.f32 %v521, %v544
    %v556 = vmul.f32 %v522, %v554
    %v558 = vperm.slane %v504, 0
    %v560 = vmul.f32 %v555, %v558
    %v561 = vmul.f32 %v556, %v558
    %v563 = vperm.slane %v505, 0
    %v565 = vadd.f32 %v560, %v563
    %v566 = vadd.f32 %v561, %v563
    %v567 = vld [vmem:[%s8] sm:$0xff]
    %v568 = vld [vmem:[%s8 + $0x8] sm:$0xff]
    %v569 = vld [vmem:[%s8 + $0x10] sm:$0xff]
    %v570 = vld [vmem:[%s8 + $0x18] sm:$0xff]
    %v571 = vld [vmem:[%s9] sm:$0x1]
    %v573 = vperm.slane %v571, 0
    %v576 = vsel %vm60, %v565, 0
    %v579 = vsel %vm60, %v566, 0
    %581 = vmatpush.msra.mxu0 0.0
    %582 = vmatpush.msra.mxu0 0.0
    %583 = vmatpush.msra.mxu0 0.0
    %584 = vmatpush.msra.mxu0 0.0
    %585 = vmatpush.msra.mxu0 0.0
    %586 = vmatpush.msra.mxu0 0.0
    %587 = vmatpush.msra.mxu0 0.0
    %588 = vmatpush.msra.mxu0 0.0
    %589 = vmatpush.msra.mxu0 0.0
    %590 = vmatpush.msra.mxu0 0.0
    %591 = vmatpush.msra.mxu0 0.0
    %592 = vmatpush.msra.mxu0 0.0
    %593 = vmatpush.msra.mxu0 %v570
    %594 = vmatpush.msra.mxu0 %v569
    %595 = vmatpush.msra.mxu0 %v568
    %596 = vmatpush.msra.mxu0 %v567
    %597 = vmatmul.f32.gmra.mxu0 %v576
    %v598 = vpop.f32.mrf.mxu0
    %v599 = vadd.f32 %v573, %v598
    %600 = vmatmul.f32.gmra.mxu0 %v579
    %v601 = vpop.f32.mrf.mxu0
    %v602 = vadd.f32 %v573, %v601
    %603 = vdwg.mxu0
    %v604 = vmax.f32 %v599, 0.0
    %v605 = vmax.f32 %v602, 0.0
    %v606 = vld [vmem:[%s10] sm:$0xff]
    %v607 = vld [vmem:[%s10 + $0x8] sm:$0xff]
    %v608 = vld [vmem:[%s10 + $0x10] sm:$0xff]
    %v609 = vld [vmem:[%s10 + $0x18] sm:$0xff]
    %v610 = vld [vmem:[%s10 + $0x20] sm:$0xff]
    %v611 = vld [vmem:[%s10 + $0x28] sm:$0xff]
    %v612 = vld [vmem:[%s10 + $0x30] sm:$0xff]
    %v613 = vld [vmem:[%s10 + $0x38] sm:$0xff]
    %v614 = vld [vmem:[%s11] sm:$0x1]
    %v616 = vperm.slane %v614, 0
    %vm618 = vcmask 523264
    %v620 = vsel %vm618, %v604, 0
    %v623 = vsel %vm618, %v605, 0
    %625 = vmatpush.msra.mxu0 0.0
    %626 = vmatpush.msra.mxu0 0.0
    %627 = vmatpush.msra.mxu0 0.0
    %628 = vmatpush.msra.mxu0 0.0
    %629 = vmatpush.msra.mxu0 0.0
    %630 = vmatpush.msra.mxu0 0.0
    %631 = vmatpush.msra.mxu0 0.0
    %632 = vmatpush.msra.mxu0 0.0
    %633 = vmatpush.msra.mxu0 %v613
    %634 = vmatpush.msra.mxu0 %v612
    %635 = vmatpush.msra.mxu0 %v611
    %636 = vmatpush.msra.mxu0 %v610
    %637 = vmatpush.msra.mxu0 %v609
    %638 = vmatpush.msra.mxu0 %v608
    %639 = vmatpush.msra.mxu0 %v607
    %640 = vmatpush.msra.mxu0 %v606
    %641 = vmatmul.f32.gmra.mxu0 %v620
    %v642 = vpop.f32.mrf.mxu0
    %v643 = vadd.f32 %v616, %v642
    %644 = vmatmul.f32.gmra.mxu0 %v623
    %v645 = vpop.f32.mrf.mxu0
    %v646 = vadd.f32 %v616, %v645
    %647 = vdwg.mxu0
    %v648 = vadd.f32 %v643, %v565
    %v649 = vadd.f32 %v646, %v566
    %v650 = vld [vmem:[%s12] sm:$0x1]
    %v651 = vld [vmem:[%s13] sm:$0x1]
    %v652 = vsel %vm60, %v648, 0.0
    %653 = vadd.xlane.f32.xlu0 %v652
    %v654 = vpop.xlane.xlu0 %653
    %v655 = vsel %vm60, %v649, 0.0
    %656 = vadd.xlane.f32.xlu0 %v655
    %v657 = vpop.xlane.xlu0 %656
    %v658 = vmul.f32 %v654, %v518
    %v659 = vmul.f32 %v657, %v518
    %v660 = vsub.f32 %v648, %v658
    %v661 = vsub.f32 %v649, %v659
    %v662 = vmul.f32 %v660, %v660
    %v663 = vmul.f32 %v661, %v661
    %v664 = vsel %vm60, %v662, 0.0
    %665 = vadd.xlane.f32.xlu0 %v664
    %v666 = vpop.xlane.xlu0 %665
    %v667 = vsel %vm60, %v663, 0.0
    %668 = vadd.xlane.f32.xlu0 %v667
    %v669 = vpop.xlane.xlu0 %668
    %v670 = vmul.f32 %v666, %v518
    %v671 = vmul.f32 %v669, %v518
    %v672 = vadd.f32 %v670, 1e-05
    %v673 = vadd.f32 %v671, 1e-05
    %v674 = vrsqrt.pop %v672
    %v675 = vmul.f32 %v674, %v672
    %v676 = vmul.f32 %v675, %v674
    %v677 = vmul.f32 0.5, %v676
    %v678 = vsub.f32 1.5, %v677
    %v679 = vmul.f32 %v674, %v678
    %vm680 = vweird.f32 %v672
    %vm681 = vweird.f32 %v674
    %vm682 = vmor %vm680, %vm681
    %v683 = vsel %vm682, %v674, %v679
    %v684 = vrsqrt.pop %v673
    %v685 = vmul.f32 %v684, %v673
    %v686 = vmul.f32 %v685, %v684
    %v687 = vmul.f32 0.5, %v686
    %v688 = vsub.f32 1.5, %v687
    %v689 = vmul.f32 %v684, %v688
    %vm690 = vweird.f32 %v673
    %vm691 = vweird.f32 %v684
    %vm692 = vmor %vm690, %vm691
    %v693 = vsel %vm692, %v684, %v689
    %v694 = vmul.f32 %v660, %v683
    %v695 = vmul.f32 %v661, %v693
    %v697 = vperm.slane %v650, 0
    %v699 = vmul.f32 %v694, %v697
    %v700 = vmul.f32 %v695, %v697
    %v702 = vperm.slane %v651, 0
    %v704 = vadd.f32 %v699, %v702
    %v705 = vadd.f32 %v700, %v702
    %706 = vrot.lane.b32.xlu0 %v404, 16
    %v707 = vpop.permute.xlu0 %706
    %708 = vrot.lane.b32.xlu0 %v405, 16
    %v709 = vpop.permute.xlu0 %708
    %v712 = vsel %vm158, %v214, %v707
    %v713 = vsel %vm158, %v215, %v709
    %714 = vst.msk [vmem:[%s15] sm:$0xff] %vm60, %v712
    %715 = vst.msk [vmem:[%s15 + $0x8] sm:$0xff] %vm60, %v713
    %s716 = scalar_lea.vmem %s2, 192
    %v717 = vld [vmem:[%s716] sm:$0xff]
    %v718 = vld [vmem:[%s716 + $0x8] sm:$0xff]
    %v719 = vld [vmem:[%s716 + $0x10] sm:$0xff]
    %v720 = vld [vmem:[%s716 + $0x18] sm:$0xff]
    %s721 = scalar_lea.vmem %s3, 6
    %v722 = vld [vmem:[%s721] sm:$0x1]
    %v724 = vperm.slane %v722, 0
    %v727 = vsel %vm60, %v704, 0
    %v730 = vsel %vm60, %v705, 0
    %732 = vmatpush.msra.mxu0 0.0
    %733 = vmatpush.msra.mxu0 0.0
    %734 = vmatpush.msra.mxu0 0.0
    %735 = vmatpush.msra.mxu0 0.0
    %736 = vmatpush.msra.mxu0 0.0
    %737 = vmatpush.msra.mxu0 0.0
    %738 = vmatpush.msra.mxu0 0.0
    %739 = vmatpush.msra.mxu0 0.0
    %740 = vmatpush.msra.mxu0 0.0
    %741 = vmatpush.msra.mxu0 0.0
    %742 = vmatpush.msra.mxu0 0.0
    %743 = vmatpush.msra.mxu0 0.0
    %744 = vmatpush.msra.mxu0 %v720
    %745 = vmatpush.msra.mxu0 %v719
    %746 = vmatpush.msra.mxu0 %v718
    %747 = vmatpush.msra.mxu0 %v717
    %748 = vmatmul.f32.gmra.mxu0 %v727
    %v749 = vpop.f32.mrf.mxu0
    %v750 = vadd.f32 %v724, %v749
    %751 = vmatmul.f32.gmra.mxu0 %v730
    %v752 = vpop.f32.mrf.mxu0
    %v753 = vadd.f32 %v724, %v752
    %754 = vdwg.mxu0
    %s755 = scalar_lea.vmem %s2, 256
    %v756 = vld [vmem:[%s755] sm:$0xff]
    %v757 = vld [vmem:[%s755 + $0x8] sm:$0xff]
    %v758 = vld [vmem:[%s755 + $0x10] sm:$0xff]
    %v759 = vld [vmem:[%s755 + $0x18] sm:$0xff]
    %s760 = scalar_lea.vmem %s3, 8
    %v761 = vld [vmem:[%s760] sm:$0x1]
    %v763 = vperm.slane %v761, 0
    %765 = vmatpush.msra.mxu0 0.0
    %766 = vmatpush.msra.mxu0 0.0
    %767 = vmatpush.msra.mxu0 0.0
    %768 = vmatpush.msra.mxu0 0.0
    %769 = vmatpush.msra.mxu0 0.0
    %770 = vmatpush.msra.mxu0 0.0
    %771 = vmatpush.msra.mxu0 0.0
    %772 = vmatpush.msra.mxu0 0.0
    %773 = vmatpush.msra.mxu0 0.0
    %774 = vmatpush.msra.mxu0 0.0
    %775 = vmatpush.msra.mxu0 0.0
    %776 = vmatpush.msra.mxu0 0.0
    %777 = vmatpush.msra.mxu0 %v759
    %778 = vmatpush.msra.mxu0 %v758
    %779 = vmatpush.msra.mxu0 %v757
    %780 = vmatpush.msra.mxu0 %v756
    %781 = vmatmul.f32.gmra.mxu0 %v727
    %v782 = vpop.f32.mrf.mxu0
    %v783 = vadd.f32 %v763, %v782
    %784 = vmatmul.f32.gmra.mxu0 %v730
    %v785 = vpop.f32.mrf.mxu0
    %v786 = vadd.f32 %v763, %v785
    %787 = vdwg.mxu0
    %s788 = scalar_lea.vmem %s2, 320
    %v789 = vld [vmem:[%s788] sm:$0xff]
    %v790 = vld [vmem:[%s788 + $0x8] sm:$0xff]
    %v791 = vld [vmem:[%s788 + $0x10] sm:$0xff]
    %v792 = vld [vmem:[%s788 + $0x18] sm:$0xff]
    %s793 = scalar_lea.vmem %s3, 10
    %v794 = vld [vmem:[%s793] sm:$0x1]
    %v796 = vperm.slane %v794, 0
    %798 = vmatpush.msra.mxu0 0.0
    %799 = vmatpush.msra.mxu0 0.0
    %800 = vmatpush.msra.mxu0 0.0
    %801 = vmatpush.msra.mxu0 0.0
    %802 = vmatpush.msra.mxu0 0.0
    %803 = vmatpush.msra.mxu0 0.0
    %804 = vmatpush.msra.mxu0 0.0
    %805 = vmatpush.msra.mxu0 0.0
    %806 = vmatpush.msra.mxu0 0.0
    %807 = vmatpush.msra.mxu0 0.0
    %808 = vmatpush.msra.mxu0 0.0
    %809 = vmatpush.msra.mxu0 0.0
    %810 = vmatpush.msra.mxu0 %v792
    %811 = vmatpush.msra.mxu0 %v791
    %812 = vmatpush.msra.mxu0 %v790
    %813 = vmatpush.msra.mxu0 %v789
    %814 = vmatmul.f32.gmra.mxu0 %v727
    %v815 = vpop.f32.mrf.mxu0
    %v816 = vadd.f32 %v796, %v815
    %817 = vmatmul.f32.gmra.mxu0 %v730
    %v818 = vpop.f32.mrf.mxu0
    %v819 = vadd.f32 %v796, %v818
    %820 = vdwg.mxu0
    %v821 = vld [vmem:[%s1] sm:$0xff]
    %v822 = vld [vmem:[%s1 + $0x8] sm:$0xff]
    %v824 = vsel %vm158, %v750, 0
    %v827 = vsel %vm158, %v753, 0
    %v830 = vsel %vm158, %v783, 0
    %v833 = vsel %vm158, %v786, 0
    %835 = vmatpush.xpose.msra.mxu0 0.0
    %836 = vmatpush.xpose.msra.mxu0 0.0
    %837 = vmatpush.xpose.msra.mxu0 0.0
    %838 = vmatpush.xpose.msra.mxu0 0.0
    %839 = vmatpush.xpose.msra.mxu0 0.0
    %840 = vmatpush.xpose.msra.mxu0 0.0
    %841 = vmatpush.xpose.msra.mxu0 0.0
    %842 = vmatpush.xpose.msra.mxu0 0.0
    %843 = vmatpush.xpose.msra.mxu0 0.0
    %844 = vmatpush.xpose.msra.mxu0 0.0
    %845 = vmatpush.xpose.msra.mxu0 0.0
    %846 = vmatpush.xpose.msra.mxu0 0.0
    %847 = vmatpush.xpose.msra.mxu0 0.0
    %848 = vmatpush.xpose.msra.mxu0 0.0
    %849 = vmatpush.xpose.msra.mxu0 %v833
    %850 = vmatpush.xpose.msra.mxu0 %v830
    %851 = vmatmul.f32.gmra.mxu0 %v824
    %v852 = vpop.f32.mrf.mxu0
    %v853 = vadd.f32 %v821, %v852
    %854 = vmatmul.f32.gmra.mxu0 %v827
    %v855 = vpop.f32.mrf.mxu0
    %v856 = vadd.f32 %v822, %v855
    %857 = vdwg.mxu0
    %v858 = vsel %vm158, %v853, -inf
    %859 = vmax.xlane.f32.xlu0 %v858
    %v860 = vpop.xlane.xlu0 %859
    %v861 = vsel %vm158, %v856, -inf
    %862 = vmax.xlane.f32.xlu0 %v861
    %v863 = vpop.xlane.xlu0 %862
    %v864 = vsub.f32 %v853, %v860
    %v865 = vsub.f32 %v856, %v863
    %v866 = vmul.f32 %v864, 1.442695
    %v867 = vpow.pop %v866
    %v868 = vmul.f32 %v865, 1.442695
    %v869 = vpow.pop %v868
    %v870 = vsel %vm158, %v867, 0.0
    %871 = vadd.xlane.f32.xlu0 %v870
    %v872 = vpop.xlane.xlu0 %871
    %v873 = vsel %vm158, %v869, 0.0
    %874 = vadd.xlane.f32.xlu0 %v873
    %v875 = vpop.xlane.xlu0 %874
    %v876 = vrcp.pop %v872
    %v877 = vrcp.pop %v875
    %v878 = vmul.f32 %v867, %v876
    %v879 = vmul.f32 %v869, %v877
    %v881 = vsel %vm158, %v878, 0
    %v884 = vsel %vm158, %v879, 0
    %886 = vmatpush.msra.mxu0 0.0
    %887 = vmatpush.msra.mxu0 0.0
    %888 = vmatpush.msra.mxu0 0.0
    %889 = vmatpush.msra.mxu0 0.0
    %890 = vmatpush.msra.mxu0 0.0
    %891 = vmatpush.msra.mxu0 0.0
    %892 = vmatpush.msra.mxu0 0.0
    %893 = vmatpush.msra.mxu0 0.0
    %894 = vmatpush.msra.mxu0 0.0
    %895 = vmatpush.msra.mxu0 0.0
    %896 = vmatpush.msra.mxu0 0.0
    %897 = vmatpush.msra.mxu0 0.0
    %898 = vmatpush.msra.mxu0 0.0
    %899 = vmatpush.msra.mxu0 0.0
    %900 = vmatpush.msra.mxu0 %v819
    %901 = vmatpush.msra.mxu0 %v816
    %902 = vmatmul.f32.gmra.mxu0 %v881
    %v903 = vpop.f32.mrf.mxu0
    %v904 = vadd.f32 0.0, %v903
    %905 = vmatmul.f32.gmra.mxu0 %v884
    %v906 = vpop.f32.mrf.mxu0
    %v907 = vadd.f32 0.0, %v906
    %908 = vdwg.mxu0
    %s909 = scalar_lea.vmem %s4, 32
    %v910 = vld [vmem:[%s909] sm:$0xff]
    %v911 = vld [vmem:[%s909 + $0x8] sm:$0xff]
    %s912 = scalar_lea.vmem %s2, 224
    %v913 = vld [vmem:[%s912] sm:$0xff]
    %v914 = vld [vmem:[%s912 + $0x8] sm:$0xff]
    %v915 = vld [vmem:[%s912 + $0x10] sm:$0xff]
    %v916 = vld [vmem:[%s912 + $0x18] sm:$0xff]
    %s917 = scalar_lea.vmem %s3, 7
    %v918 = vld [vmem:[%s917] sm:$0x1]
    %v920 = vperm.slane %v918, 0
    %922 = vmatpush.msra.mxu0 0.0
    %923 = vmatpush.msra.mxu0 0.0
    %924 = vmatpush.msra.mxu0 0.0
    %925 = vmatpush.msra.mxu0 0.0
    %926 = vmatpush.msra.mxu0 0.0
    %927 = vmatpush.msra.mxu0 0.0
    %928 = vmatpush.msra.mxu0 0.0
    %929 = vmatpush.msra.mxu0 0.0
    %930 = vmatpush.msra.mxu0 0.0
    %931 = vmatpush.msra.mxu0 0.0
    %932 = vmatpush.msra.mxu0 0.0
    %933 = vmatpush.msra.mxu0 0.0
    %934 = vmatpush.msra.mxu0 %v916
    %935 = vmatpush.msra.mxu0 %v915
    %936 = vmatpush.msra.mxu0 %v914
    %937 = vmatpush.msra.mxu0 %v913
    %938 = vmatmul.f32.gmra.mxu0 %v727
    %v939 = vpop.f32.mrf.mxu0
    %v940 = vadd.f32 %v920, %v939
    %941 = vmatmul.f32.gmra.mxu0 %v730
    %v942 = vpop.f32.mrf.mxu0
    %v943 = vadd.f32 %v920, %v942
    %944 = vdwg.mxu0
    %s945 = scalar_lea.vmem %s2, 288
    %v946 = vld [vmem:[%s945] sm:$0xff]
    %v947 = vld [vmem:[%s945 + $0x8] sm:$0xff]
    %v948 = vld [vmem:[%s945 + $0x10] sm:$0xff]
    %v949 = vld [vmem:[%s945 + $0x18] sm:$0xff]
    %s950 = scalar_lea.vmem %s3, 9
    %v951 = vld [vmem:[%s950] sm:$0x1]
    %v953 = vperm.slane %v951, 0
    %955 = vmatpush.msra.mxu0 0.0
    %956 = vmatpush.msra.mxu0 0.0
    %957 = vmatpush.msra.mxu0 0.0
    %958 = vmatpush.msra.mxu0 0.0
    %959 = vmatpush.msra.mxu0 0.0
    %960 = vmatpush.msra.mxu0 0.0
    %961 = vmatpush.msra.mxu0 0.0
    %962 = vmatpush.msra.mxu0 0.0
    %963 = vmatpush.msra.mxu0 0.0
    %964 = vmatpush.msra.mxu0 0.0
    %965 = vmatpush.msra.mxu0 0.0
    %966 = vmatpush.msra.mxu0 0.0
    %967 = vmatpush.msra.mxu0 %v949
    %968 = vmatpush.msra.mxu0 %v948
    %969 = vmatpush.msra.mxu0 %v947
    %970 = vmatpush.msra.mxu0 %v946
    %971 = vmatmul.f32.gmra.mxu0 %v727
    %v972 = vpop.f32.mrf.mxu0
    %v973 = vadd.f32 %v953, %v972
    %974 = vmatmul.f32.gmra.mxu0 %v730
    %v975 = vpop.f32.mrf.mxu0
    %v976 = vadd.f32 %v953, %v975
    %977 = vdwg.mxu0
    %s978 = scalar_lea.vmem %s2, 352
    %v979 = vld [vmem:[%s978] sm:$0xff]
    %v980 = vld [vmem:[%s978 + $0x8] sm:$0xff]
    %v981 = vld [vmem:[%s978 + $0x10] sm:$0xff]
    %v982 = vld [vmem:[%s978 + $0x18] sm:$0xff]
    %s983 = scalar_lea.vmem %s3, 11
    %v984 = vld [vmem:[%s983] sm:$0x1]
    %v986 = vperm.slane %v984, 0
    %988 = vmatpush.msra.mxu0 0.0
    %989 = vmatpush.msra.mxu0 0.0
    %990 = vmatpush.msra.mxu0 0.0
    %991 = vmatpush.msra.mxu0 0.0
    %992 = vmatpush.msra.mxu0 0.0
    %993 = vmatpush.msra.mxu0 0.0
    %994 = vmatpush.msra.mxu0 0.0
    %995 = vmatpush.msra.mxu0 0.0
    %996 = vmatpush.msra.mxu0 0.0
    %997 = vmatpush.msra.mxu0 0.0
    %998 = vmatpush.msra.mxu0 0.0
    %999 = vmatpush.msra.mxu0 0.0
    %1000 = vmatpush.msra.mxu0 %v982
    %1001 = vmatpush.msra.mxu0 %v981
    %1002 = vmatpush.msra.mxu0 %v980
    %1003 = vmatpush.msra.mxu0 %v979
    %1004 = vmatmul.f32.gmra.mxu0 %v727
    %v1005 = vpop.f32.mrf.mxu0
    %v1006 = vadd.f32 %v986, %v1005
    %1007 = vmatmul.f32.gmra.mxu0 %v730
    %v1008 = vpop.f32.mrf.mxu0
    %v1009 = vadd.f32 %v986, %v1008
    %1010 = vdwg.mxu0
    %v1011 = vld [vmem:[%s346] sm:$0xff]
    %v1012 = vld [vmem:[%s346 + $0x8] sm:$0xff]
    %v1014 = vsel %vm158, %v940, 0
    %v1017 = vsel %vm158, %v943, 0
    %v1020 = vsel %vm158, %v973, 0
    %v1023 = vsel %vm158, %v976, 0
    %1025 = vmatpush.xpose.msra.mxu0 0.0
    %1026 = vmatpush.xpose.msra.mxu0 0.0
    %1027 = vmatpush.xpose.msra.mxu0 0.0
    %1028 = vmatpush.xpose.msra.mxu0 0.0
    %1029 = vmatpush.xpose.msra.mxu0 0.0
    %1030 = vmatpush.xpose.msra.mxu0 0.0
    %1031 = vmatpush.xpose.msra.mxu0 0.0
    %1032 = vmatpush.xpose.msra.mxu0 0.0
    %1033 = vmatpush.xpose.msra.mxu0 0.0
    %1034 = vmatpush.xpose.msra.mxu0 0.0
    %1035 = vmatpush.xpose.msra.mxu0 0.0
    %1036 = vmatpush.xpose.msra.mxu0 0.0
    %1037 = vmatpush.xpose.msra.mxu0 0.0
    %1038 = vmatpush.xpose.msra.mxu0 0.0
    %1039 = vmatpush.xpose.msra.mxu0 %v1023
    %1040 = vmatpush.xpose.msra.mxu0 %v1020
    %1041 = vmatmul.f32.gmra.mxu0 %v1014
    %v1042 = vpop.f32.mrf.mxu0
    %v1043 = vadd.f32 %v1011, %v1042
    %1044 = vmatmul.f32.gmra.mxu0 %v1017
    %v1045 = vpop.f32.mrf.mxu0
    %v1046 = vadd.f32 %v1012, %v1045
    %1047 = vdwg.mxu0
    %v1048 = vsel %vm158, %v1043, -inf
    %1049 = vmax.xlane.f32.xlu0 %v1048
    %v1050 = vpop.xlane.xlu0 %1049
    %v1051 = vsel %vm158, %v1046, -inf
    %1052 = vmax.xlane.f32.xlu0 %v1051
    %v1053 = vpop.xlane.xlu0 %1052
    %v1054 = vsub.f32 %v1043, %v1050
    %v1055 = vsub.f32 %v1046, %v1053
    %v1056 = vmul.f32 %v1054, 1.442695
    %v1057 = vpow.pop %v1056
    %v1058 = vmul.f32 %v1055, 1.442695
    %v1059 = vpow.pop %v1058
    %v1060 = vsel %vm158, %v1057, 0.0
    %1061 = vadd.xlane.f32.xlu0 %v1060
    %v1062 = vpop.xlane.xlu0 %1061
    %v1063 = vsel %vm158, %v1059, 0.0
    %1064 = vadd.xlane.f32.xlu0 %v1063
    %v1065 = vpop.xlane.xlu0 %1064
    %v1066 = vrcp.pop %v1062
    %v1067 = vrcp.pop %v1065
    %v1068 = vmul.f32 %v1057, %v1066
    %v1069 = vmul.f32 %v1059, %v1067
    %v1071 = vsel %vm158, %v1068, 0
    %v1074 = vsel %vm158, %v1069, 0
    %1076 = vmatpush.msra.mxu0 0.0
    %1077 = vmatpush.msra.mxu0 0.0
    %1078 = vmatpush.msra.mxu0 0.0
    %1079 = vmatpush.msra.mxu0 0.0
    %1080 = vmatpush.msra.mxu0 0.0
    %1081 = vmatpush.msra.mxu0 0.0
    %1082 = vmatpush.msra.mxu0 0.0
    %1083 = vmatpush.msra.mxu0 0.0
    %1084 = vmatpush.msra.mxu0 0.0
    %1085 = vmatpush.msra.mxu0 0.0
    %1086 = vmatpush.msra.mxu0 0.0
    %1087 = vmatpush.msra.mxu0 0.0
    %1088 = vmatpush.msra.mxu0 0.0
    %1089 = vmatpush.msra.mxu0 0.0
    %1090 = vmatpush.msra.mxu0 %v1009
    %1091 = vmatpush.msra.mxu0 %v1006
    %1092 = vmatmul.f32.gmra.mxu0 %v1071
    %v1093 = vpop.f32.mrf.mxu0
    %v1094 = vadd.f32 0.0, %v1093
    %1095 = vmatmul.f32.gmra.mxu0 %v1074
    %v1096 = vpop.f32.mrf.mxu0
    %v1097 = vadd.f32 0.0, %v1096
    %1098 = vdwg.mxu0
    %s1099 = scalar_lea.vmem %s4, 48
    %v1100 = vld [vmem:[%s1099] sm:$0xff]
    %v1101 = vld [vmem:[%s1099 + $0x8] sm:$0xff]
    %v1103 = vsel %vm158, %v1094, 0
    %v1106 = vsel %vm158, %v1097, 0
    %1108 = vmatpush.msra.mxu0 0.0
    %1109 = vmatpush.msra.mxu0 0.0
    %1110 = vmatpush.msra.mxu0 0.0
    %1111 = vmatpush.msra.mxu0 0.0
    %1112 = vmatpush.msra.mxu0 0.0
    %1113 = vmatpush.msra.mxu0 0.0
    %1114 = vmatpush.msra.mxu0 0.0
    %1115 = vmatpush.msra.mxu0 0.0
    %1116 = vmatpush.msra.mxu0 0.0
    %1117 = vmatpush.msra.mxu0 0.0
    %1118 = vmatpush.msra.mxu0 0.0
    %1119 = vmatpush.msra.mxu0 0.0
    %1120 = vmatpush.msra.mxu0 0.0
    %1121 = vmatpush.msra.mxu0 0.0
    %1122 = vmatpush.msra.mxu0 %v1101
    %1123 = vmatpush.msra.mxu0 %v1100
    %1124 = vmatmul.f32.gmra.mxu0 %v1103
    %v1125 = vpop.f32.mrf.mxu0
    %v1126 = vadd.f32 0.0, %v1125
    %1127 = vmatmul.f32.gmra.mxu0 %v1106
    %v1128 = vpop.f32.mrf.mxu0
    %v1129 = vadd.f32 0.0, %v1128
    %1130 = vdwg.mxu0
    %v1132 = vsel %vm158, %v904, 0
    %v1135 = vsel %vm158, %v907, 0
    %1137 = vmatpush.msra.mxu0 0.0
    %1138 = vmatpush.msra.mxu0 0.0
    %1139 = vmatpush.msra.mxu0 0.0
    %1140 = vmatpush.msra.mxu0 0.0
    %1141 = vmatpush.msra.mxu0 0.0
    %1142 = vmatpush.msra.mxu0 0.0
    %1143 = vmatpush.msra.mxu0 0.0
    %1144 = vmatpush.msra.mxu0 0.0
    %1145 = vmatpush.msra.mxu0 0.0
    %1146 = vmatpush.msra.mxu0 0.0
    %1147 = vmatpush.msra.mxu0 0.0
    %1148 = vmatpush.msra.mxu0 0.0
    %1149 = vmatpush.msra.mxu0 0.0
    %1150 = vmatpush.msra.mxu0 0.0
    %1151 = vmatpush.msra.mxu0 %v911
    %1152 = vmatpush.msra.mxu0 %v910
    %1153 = vmatmul.f32.gmra.mxu0 %v1132
    %v1154 = vpop.f32.mrf.mxu0
    %v1155 = vadd.f32 %v1126, %v1154
    %1156 = vmatmul.f32.gmra.mxu0 %v1135
    %v1157 = vpop.f32.mrf.mxu0
    %v1158 = vadd.f32 %v1129, %v1157
    %1159 = vdwg.mxu0
    %s1160 = scalar_lea.vmem %s5, 1
    %v1161 = vld [vmem:[%s1160] sm:$0x1]
    %v1163 = vperm.slane %v1161, 0
    %v1165 = vadd.f32 %v1155, %v1163
    %v1166 = vadd.f32 %v1158, %v1163
    %v1167 = vadd.f32 %v1165, %v704
    %v1168 = vadd.f32 %v1166, %v705
    %s1169 = scalar_lea.vmem %s6, 1
    %v1170 = vld [vmem:[%s1169] sm:$0x1]
    %s1171 = scalar_lea.vmem %s7, 1
    %v1172 = vld [vmem:[%s1171] sm:$0x1]
    %v1173 = vsel %vm60, %v1167, 0.0
    %1174 = vadd.xlane.f32.xlu0 %v1173
    %v1175 = vpop.xlane.xlu0 %1174
    %v1176 = vsel %vm60, %v1168, 0.0
    %1177 = vadd.xlane.f32.xlu0 %v1176
    %v1178 = vpop.xlane.xlu0 %1177
    %v1179 = vmul.f32 %v1175, %v518
    %v1180 = vmul.f32 %v1178, %v518
    %v1181 = vsub.f32 %v1167, %v1179
    %v1182 = vsub.f32 %v1168, %v1180
    %v1183 = vmul.f32 %v1181, %v1181
    %v1184 = vmul.f32 %v1182, %v1182
    %v1185 = vsel %vm60, %v1183, 0.0
    %1186 = vadd.xlane.f32.xlu0 %v1185
    %v1187 = vpop.xlane.xlu0 %1186
    %v1188 = vsel %vm60, %v1184, 0.0
    %1189 = vadd.xlane.f32.xlu0 %v1188
    %v1190 = vpop.xlane.xlu0 %1189
    %v1191 = vmul.f32 %v1187, %v518
    %v1192 = vmul.f32 %v1190, %v518
    %v1193 = vadd.f32 %v1191, 1e-05
    %v1194 = vadd.f32 %v1192, 1e-05
    %v1195 = vrsqrt.pop %v1193
    %v1196 = vmul.f32 %v1195, %v1193
    %v1197 = vmul.f32 %v1196, %v1195
    %v1198 = vmul.f32 0.5, %v1197
    %v1199 = vsub.f32 1.5, %v1198
    %v1200 = vmul.f32 %v1195, %v1199
    %vm1201 = vweird.f32 %v1193
    %vm1202 = vweird.f32 %v1195
    %vm1203 = vmor %vm1201, %vm1202
    %v1204 = vsel %vm1203, %v1195, %v1200
    %v1205 = vrsqrt.pop %v1194
    %v1206 = vmul.f32 %v1205, %v1194
    %v1207 = vmul.f32 %v1206, %v1205
    %v1208 = vmul.f32 0.5, %v1207
    %v1209 = vsub.f32 1.5, %v1208
    %v1210 = vmul.f32 %v1205, %v1209
    %vm1211 = vweird.f32 %v1194
    %vm1212 = vweird.f32 %v1205
    %vm1213 = vmor %vm1211, %vm1212
    %v1214 = vsel %vm1213, %v1205, %v1210
    %v1215 = vmul.f32 %v1181, %v1204
    %v1216 = vmul.f32 %v1182, %v1214
    %v1218 = vperm.slane %v1170, 0
    %v1220 = vmul.f32 %v1215, %v1218
    %v1221 = vmul.f32 %v1216, %v1218
    %v1223 = vperm.slane %v1172, 0
    %v1225 = vadd.f32 %v1220, %v1223
    %v1226 = vadd.f32 %v1221, %v1223
    %s1227 = scalar_lea.vmem %s8, 32
    %v1228 = vld [vmem:[%s1227] sm:$0xff]
    %v1229 = vld [vmem:[%s1227 + $0x8] sm:$0xff]
    %v1230 = vld [vmem:[%s1227 + $0x10] sm:$0xff]
    %v1231 = vld [vmem:[%s1227 + $0x18] sm:$0xff]
    %s1232 = scalar_lea.vmem %s9, 1
    %v1233 = vld [vmem:[%s1232] sm:$0x1]
    %v1235 = vperm.slane %v1233, 0
    %v1238 = vsel %vm60, %v1225, 0
    %v1241 = vsel %vm60, %v1226, 0
    %1243 = vmatpush.msra.mxu0 0.0
    %1244 = vmatpush.msra.mxu0 0.0
    %1245 = vmatpush.msra.mxu0 0.0
    %1246 = vmatpush.msra.mxu0 0.0
    %1247 = vmatpush.msra.mxu0 0.0
    %1248 = vmatpush.msra.mxu0 0.0
    %1249 = vmatpush.msra.mxu0 0.0
    %1250 = vmatpush.msra.mxu0 0.0
    %1251 = vmatpush.msra.mxu0 0.0
    %1252 = vmatpush.msra.mxu0 0.0
    %1253 = vmatpush.msra.mxu0 0.0
    %1254 = vmatpush.msra.mxu0 0.0
    %1255 = vmatpush.msra.mxu0 %v1231
    %1256 = vmatpush.msra.mxu0 %v1230
    %1257 = vmatpush.msra.mxu0 %v1229
    %1258 = vmatpush.msra.mxu0 %v1228
    %1259 = vmatmul.f32.gmra.mxu0 %v1238
    %v1260 = vpop.f32.mrf.mxu0
    %v1261 = vadd.f32 %v1235, %v1260
    %1262 = vmatmul.f32.gmra.mxu0 %v1241
    %v1263 = vpop.f32.mrf.mxu0
    %v1264 = vadd.f32 %v1235, %v1263
    %1265 = vdwg.mxu0
    %v1266 = vmax.f32 %v1261, 0.0
    %v1267 = vmax.f32 %v1264, 0.0
    %s1268 = scalar_lea.vmem %s10, 64
    %v1269 = vld [vmem:[%s1268] sm:$0xff]
    %v1270 = vld [vmem:[%s1268 + $0x8] sm:$0xff]
    %v1271 = vld [vmem:[%s1268 + $0x10] sm:$0xff]
    %v1272 = vld [vmem:[%s1268 + $0x18] sm:$0xff]
    %v1273 = vld [vmem:[%s1268 + $0x20] sm:$0xff]
    %v1274 = vld [vmem:[%s1268 + $0x28] sm:$0xff]
    %v1275 = vld [vmem:[%s1268 + $0x30] sm:$0xff]
    %v1276 = vld [vmem:[%s1268 + $0x38] sm:$0xff]
    %s1277 = scalar_lea.vmem %s11, 1
    %v1278 = vld [vmem:[%s1277] sm:$0x1]
    %v1280 = vperm.slane %v1278, 0
    %v1283 = vsel %vm618, %v1266, 0
    %v1286 = vsel %vm618, %v1267, 0
    %1288 = vmatpush.msra.mxu0 0.0
    %1289 = vmatpush.msra.mxu0 0.0
    %1290 = vmatpush.msra.mxu0 0.0
    %1291 = vmatpush.msra.mxu0 0.0
    %1292 = vmatpush.msra.mxu0 0.0
    %1293 = vmatpush.msra.mxu0 0.0
    %1294 = vmatpush.msra.mxu0 0.0
    %1295 = vmatpush.msra.mxu0 0.0
    %1296 = vmatpush.msra.mxu0 %v1276
    %1297 = vmatpush.msra.mxu0 %v1275
    %1298 = vmatpush.msra.mxu0 %v1274
    %1299 = vmatpush.msra.mxu0 %v1273
    %1300 = vmatpush.msra.mxu0 %v1272
    %1301 = vmatpush.msra.mxu0 %v1271
    %1302 = vmatpush.msra.mxu0 %v1270
    %1303 = vmatpush.msra.mxu0 %v1269
    %1304 = vmatmul.f32.gmra.mxu0 %v1283
    %v1305 = vpop.f32.mrf.mxu0
    %v1306 = vadd.f32 %v1280, %v1305
    %1307 = vmatmul.f32.gmra.mxu0 %v1286
    %v1308 = vpop.f32.mrf.mxu0
    %v1309 = vadd.f32 %v1280, %v1308
    %1310 = vdwg.mxu0
    %v1311 = vadd.f32 %v1306, %v1225
    %v1312 = vadd.f32 %v1309, %v1226
    %s1313 = scalar_lea.vmem %s12, 1
    %v1314 = vld [vmem:[%s1313] sm:$0x1]
    %s1315 = scalar_lea.vmem %s13, 1
    %v1316 = vld [vmem:[%s1315] sm:$0x1]
    %v1317 = vsel %vm60, %v1311, 0.0
    %1318 = vadd.xlane.f32.xlu0 %v1317
    %v1319 = vpop.xlane.xlu0 %1318
    %v1320 = vsel %vm60, %v1312, 0.0
    %1321 = vadd.xlane.f32.xlu0 %v1320
    %v1322 = vpop.xlane.xlu0 %1321
    %v1323 = vmul.f32 %v1319, %v518
    %v1324 = vmul.f32 %v1322, %v518
    %v1325 = vsub.f32 %v1311, %v1323
    %v1326 = vsub.f32 %v1312, %v1324
    %v1327 = vmul.f32 %v1325, %v1325
    %v1328 = vmul.f32 %v1326, %v1326
    %v1329 = vsel %vm60, %v1327, 0.0
    %1330 = vadd.xlane.f32.xlu0 %v1329
    %v1331 = vpop.xlane.xlu0 %1330
    %v1332 = vsel %vm60, %v1328, 0.0
    %1333 = vadd.xlane.f32.xlu0 %v1332
    %v1334 = vpop.xlane.xlu0 %1333
    %v1335 = vmul.f32 %v1331, %v518
    %v1336 = vmul.f32 %v1334, %v518
    %v1337 = vadd.f32 %v1335, 1e-05
    %v1338 = vadd.f32 %v1336, 1e-05
    %v1339 = vrsqrt.pop %v1337
    %v1340 = vmul.f32 %v1339, %v1337
    %v1341 = vmul.f32 %v1340, %v1339
    %v1342 = vmul.f32 0.5, %v1341
    %v1343 = vsub.f32 1.5, %v1342
    %v1344 = vmul.f32 %v1339, %v1343
    %vm1345 = vweird.f32 %v1337
    %vm1346 = vweird.f32 %v1339
    %vm1347 = vmor %vm1345, %vm1346
    %v1348 = vsel %vm1347, %v1339, %v1344
    %v1349 = vrsqrt.pop %v1338
    %v1350 = vmul.f32 %v1349, %v1338
    %v1351 = vmul.f32 %v1350, %v1349
    %v1352 = vmul.f32 0.5, %v1351
    %v1353 = vsub.f32 1.5, %v1352
    %v1354 = vmul.f32 %v1349, %v1353
    %vm1355 = vweird.f32 %v1338
    %vm1356 = vweird.f32 %v1349
    %vm1357 = vmor %vm1355, %vm1356
    %v1358 = vsel %vm1357, %v1349, %v1354
    %v1359 = vmul.f32 %v1325, %v1348
    %v1360 = vmul.f32 %v1326, %v1358
    %v1362 = vperm.slane %v1314, 0
    %v1364 = vmul.f32 %v1359, %v1362
    %v1365 = vmul.f32 %v1360, %v1362
    %v1367 = vperm.slane %v1316, 0
    %v1369 = vadd.f32 %v1364, %v1367
    %v1370 = vadd.f32 %v1365, %v1367
    %1371 = vrot.lane.b32.xlu0 %v1068, 16
    %v1372 = vpop.permute.xlu0 %1371
    %1373 = vrot.lane.b32.xlu0 %v1069, 16
    %v1374 = vpop.permute.xlu0 %1373
    %v1377 = vsel %vm158, %v878, %v1372
    %v1378 = vsel %vm158, %v879, %v1374
    %1381 = vrot.lane.b32.xlu0 %v1377, 32
    %v1382 = vpop.permute.xlu0 %1381
    %1383 = vrot.lane.b32.xlu0 %v1378, 32
    %v1384 = vpop.permute.xlu0 %1383
    %vm1387 = vcmask 523520
    %1388 = vst.msk [vmem:[%s15] sm:$0xff] %vm1387, %v1382
    %1389 = vst.msk [vmem:[%s15 + $0x8] sm:$0xff] %vm1387, %v1384
    %1390 = vst.msk [vmem:[#allocation2] sm:$0xff] %vm60, %v1369
    %1391 = vst.msk [vmem:[#allocation2 + $0x8] sm:$0xff] %vm60, %v1370
    // Predicated region
    $region58: #{encoder_forward.1} parent=1 // pred_check
      _
    $region59: #{encoder_forward.1} parent=1 // pred_check_branch
      %1393 = sbr.rel (0) target = $region61
    $region60: #{encoder_forward.1} parent=1 // pred_region
      %1395 = vsyncadd [#allocation3], 0
      %s1396 = sshll.u32 [#allocation2], 4
      %s1397 = int_to_ptr.vmem [resolvable:$true] %s1396
      %s1398 = sshll.u32 %s14, 4
      %s1399 = int_to_ptr.hbm [resolvable:$true] %s1398
      %1404 = dma.vmem_to_hbm [thread:$0]  %s1397, 256, %s1399, [#allocation3], 128, 128, 8
    $region61: #{encoder_forward.1} parent=1 // pred_fallthru
      _
    // Predicated region
    $region62: #{encoder_forward.1} parent=1 // pred_check
      _
    $region63: #{encoder_forward.1} parent=1 // pred_check_branch
      %1406 = sbr.rel (0) target = $region65
    $region64: #{encoder_forward.1} parent=1 // pred_region
      _
    $region65: #{encoder_forward.1} parent=1 // pred_fallthru
      _
    // Predicated region
    $region66: #{encoder_forward.1} parent=1 // pred_check
      _
    $region67: #{encoder_forward.1} parent=1 // pred_check_branch
      %1408 = sbr.rel (0) target = $region69
    $region68: #{encoder_forward.1} parent=1 // pred_region
      %1410 = dma.done [#allocation3], 256
    $region69: #{encoder_forward.1} parent=1 // pred_fallthru
      _
    // Predicated region
    $region70: #{encoder_forward.1} parent=1 // pred_check
      _
    $region71: #{encoder_forward.1} parent=1 // pred_check_branch
      %1412 = sbr.rel (0) target = $region73
    $region72: #{encoder_forward.1} parent=1 // pred_region
      _
    $region73: #{encoder_forward.1} parent=1 // pred_fallthru
      _
    %1413 = vsyncpa [#allocation3], 1

</llo_original>
